<compile_context>
chip_gen: v7x
topology: tpu7x:2x2x1
jax: 0.10.0
libtpu: 0.0.40
codegen_flags: <defaults>
</compile_context>

<pallas_src>
import numpy as np
import jax
import jax.numpy as jnp
from jax.experimental import pallas as pl
from jax.experimental.pallas import tpu as pltpu

BINS = (1, 2, 3, 6)
N_BINS = len(BINS)
BN_EPS = 1e-5


# --------------------------------------------------------------------------
# Host-side helpers: exact PyTorch adaptive-avg-pool / bilinear-resize matrices
# --------------------------------------------------------------------------
def adaptive_pool_matrix(out_size, in_size):
    """M[i, j] s.t. pooled = M @ x reproduces nn.AdaptiveAvgPool (1-D)."""
    M = np.zeros((out_size, in_size), np.float32)
    for i in range(out_size):
        start = (i * in_size) // out_size
        end = -(-((i + 1) * in_size) // out_size)  # ceil
        M[i, start:end] = 1.0 / (end - start)
    return M


def bilinear_upsample_matrix(out_size, in_size):
    """M[o, i] s.t. out = M @ x reproduces F.interpolate(bilinear, align_corners=False) (1-D)."""
    M = np.zeros((out_size, in_size), np.float32)
    scale = in_size / out_size
    for o in range(out_size):
        src = (o + 0.5) * scale - 0.5
        src = max(src, 0.0)
        i0 = min(int(np.floor(src)), in_size - 1)
        i1 = min(i0 + 1, in_size - 1)
        l1 = src - i0
        M[o, i0] += 1.0 - l1
        M[o, i1] += l1
    return M


def fold_bn(gamma, beta, mean, var, eps=BN_EPS):
    scale = gamma / jnp.sqrt(var + eps)
    shift = beta - mean * scale
    return scale.reshape(1, -1), shift.reshape(1, -1)


# --------------------------------------------------------------------------
# Kernel A: pooled-pyramid projection (reduction over HW tiles)
# --------------------------------------------------------------------------
def _make_pyramid_kernel(rd, row_offsets):
    off1, off2, off3, off4 = row_offsets  # cumulative bin*bin row offsets

    def kernel(x_ref, p_ref, wbcat_ref, shcat_ref, wfb_ref, y_ref, pooled_acc):
        t = pl.program_id(1)

        @pl.when(t == 0)
        def _():
            pooled_acc[...] = jnp.zeros_like(pooled_acc)

        # stacked adaptive average pooling for all bins, accumulated over HW tiles
        pooled_acc[...] += jnp.dot(p_ref[...], x_ref[...].astype(jnp.float32),
                                   preferred_element_type=jnp.float32)

        @pl.when(t == pl.num_programs(1) - 1)
        def _():
            # per-bin 1x1 conv (+ folded BN) at pooled resolution, all bins at once
            z = jnp.dot(pooled_acc[...].astype(jnp.bfloat16), wbcat_ref[...],
                        preferred_element_type=jnp.float32) + shcat_ref[...]
            # 0/1 bin block mask generated in-kernel, fused into the ReLU:
            # pooled row r belongs to bin row_bin(r); conv column c to bin c//rd.
            rows = jax.lax.broadcasted_iota(jnp.int32, z.shape, 0)
            cols = jax.lax.broadcasted_iota(jnp.int32, z.shape, 1)
            row_bin = ((rows >= off1).astype(jnp.int32)
                       + (rows >= off2).astype(jnp.int32)
                       + (rows >= off3).astype(jnp.int32)
                       + (rows >= off4).astype(jnp.int32))   # padded rows -> 4
            col_bin = ((cols >= rd).astype(jnp.int32)
                       + (cols >= 2 * rd).astype(jnp.int32)
                       + (cols >= 3 * rd).astype(jnp.int32))
            z = jnp.where(row_bin == col_bin, jnp.maximum(z, 0.0), 0.0)
            # pyramid half of the final 1x1 conv at pooled resolution (reassociated)
            y_ref[...] = jnp.dot(z.astype(jnp.bfloat16), wfb_ref[...],
                                 preferred_element_type=jnp.float32
                                 ).astype(y_ref.dtype)

    return kernel


# --------------------------------------------------------------------------
# Kernel B: per-HW-tile identity branch + upsampled pyramid + final ReLU
# --------------------------------------------------------------------------
def _output_kernel(x_ref, u_ref, y_ref, wfx_ref, shf_ref, out_ref):
    acc = jnp.dot(x_ref[...], wfx_ref[...], preferred_element_type=jnp.float32)
    acc = acc + jnp.dot(u_ref[...], y_ref[...], preferred_element_type=jnp.float32)
    out_ref[...] = jnp.maximum(acc + shf_ref[...], 0.0).astype(out_ref.dtype)


# --------------------------------------------------------------------------
# Wrapper
# --------------------------------------------------------------------------
def adaptive_pyramid_pooling(x_flat, p_all, u_all, wfx, wb_cat, sh_cat, wfb_s,
                             shf, *, rd, row_offsets, tile_hw=128,
                             out_dtype=jnp.bfloat16):
    """x_flat: (N, H*W, Cin) bf16.  Returns (N, H*W, out_dim) in out_dtype."""
    N, HW, Cin = x_flat.shape
    S_PAD = p_all.shape[0]
    OUT = wfx.shape[1]
    assert HW % tile_hw == 0, "HW must be a multiple of tile_hw"
    T = HW // tile_hw
    rd_cols = wb_cat.shape[1]
    out_bytes = np.dtype(out_dtype).itemsize

    # At demo sizes this matches the v6e/v7x default; at production size it
    # from the real per-step footprint (constants x1 + 2*x tile + 2*out tile).
    vmem_limit = 32 * 1024 * 1024

    # -------- phase A: per-batch (S_PAD, OUT) pyramid projection -----------
    cost_a = pl.CostEstimate(
        flops=2 * N * (HW * S_PAD * Cin + S_PAD * Cin * rd_cols
                       + S_PAD * rd_cols * OUT),
        transcendentals=0,
        bytes_accessed=(x_flat.size * 2 + p_all.size * 4 + wb_cat.size * 2
                        + sh_cat.size * 4 + wfb_s.size * 2
                        + N * S_PAD * OUT * 2))
    y = pl.pallas_call(
        _make_pyramid_kernel(rd, row_offsets),
        out_shape=jax.ShapeDtypeStruct((N, S_PAD, OUT), jnp.bfloat16),
        grid=(N, T),
        in_specs=[
            pl.BlockSpec((None, tile_hw, Cin), lambda n, t: (n, t, 0)),
            pl.BlockSpec((S_PAD, tile_hw), lambda n, t: (0, t)),
            pl.BlockSpec(wb_cat.shape, lambda n, t: (0, 0)),
            pl.BlockSpec(sh_cat.shape, lambda n, t: (0, 0)),
            pl.BlockSpec(wfb_s.shape, lambda n, t: (0, 0)),
        ],
        out_specs=pl.BlockSpec((None, S_PAD, OUT), lambda n, t: (n, 0, 0)),
        scratch_shapes=[pltpu.VMEM((S_PAD, Cin), jnp.float32)],
        compiler_params=pltpu.CompilerParams(
            dimension_semantics=("parallel", "arbitrary"),
            vmem_limit_bytes=vmem_limit),
        cost_estimate=cost_a,
    )(x_flat, p_all, wb_cat, sh_cat, wfb_s)

    # -------- phase B: per-tile identity matmul + stacked upsample ----------
    cost_b = pl.CostEstimate(
        flops=2 * N * HW * (Cin + S_PAD) * OUT,
        transcendentals=0,
        bytes_accessed=(x_flat.size * 2 + u_all.size * 2 + y.size * 2
                        + wfx.size * 2 + shf.size * 4
                        + N * HW * OUT * out_bytes))
    out = pl.pallas_call(
        _output_kernel,
        out_shape=jax.ShapeDtypeStruct((N, HW, OUT), out_dtype),
        grid=(N, T),
        in_specs=[
            pl.BlockSpec((None, tile_hw, Cin), lambda n, t: (n, t, 0)),
            pl.BlockSpec((tile_hw, S_PAD), lambda n, t: (t, 0)),
            pl.BlockSpec((None, S_PAD, OUT), lambda n, t: (n, 0, 0)),
            pl.BlockSpec(wfx.shape, lambda n, t: (0, 0)),
            pl.BlockSpec(shf.shape, lambda n, t: (0, 0)),
        ],
        out_specs=pl.BlockSpec((None, tile_hw, OUT), lambda n, t: (n, t, 0)),
        compiler_params=pltpu.CompilerParams(
            dimension_semantics=("parallel", "parallel"),
            vmem_limit_bytes=vmem_limit),
        cost_estimate=cost_b,
    )(x_flat, u_all, y, wfx, shf)
    return out


# --------------------------------------------------------------------------
# References
# --------------------------------------------------------------------------
def reference_forward(x_nchw, axis_mats, bin_weights, wf_full, scf, shf):
    """Literal f32 PSPNet math: pool -> conv/bn/relu -> upsample -> concat -> conv/bn/relu."""
    x = jnp.transpose(x_nchw, (0, 2, 3, 1))  # NHWC
    outs = [x]
    for i in range(N_BINS):
        Ph, Pw, Uh, Uw = axis_mats[i]
        Wb, sc, sh = bin_weights[i]
        p1 = jnp.einsum('ph,nhwc->npwc', Ph, x)
        pooled = jnp.einsum('qw,npwc->npqc', Pw, p1)
        z = jnp.einsum('npqc,cd->npqd', pooled, Wb)
        z = jnp.maximum(z * sc.reshape(1, 1, 1, -1) + sh.reshape(1, 1, 1, -1), 0.0)
        u1 = jnp.einsum('hp,npqd->nhqd', Uh, z)
        up = jnp.einsum('wq,nhqd->nhwd', Uw, u1)
        outs.append(up)
    cat = jnp.concatenate(outs, axis=-1)
    out = jnp.einsum('nhwc,cd->nhwd', cat, wf_full)
    out = jnp.maximum(out * scf.reshape(1, 1, 1, -1) + shf.reshape(1, 1, 1, -1), 0.0)
    N, H, W, D = out.shape
    return out.reshape(N, H * W, D)


def matched_reference(xb, p_all, u_all, wfx, wb_cat, sh_cat, wfb_s, shf,
                      rd, row_offsets):
    """Same folded / stacked / bf16 formulation as the kernels, in plain jnp."""
    f32 = jnp.float32
    S_PAD, _ = p_all.shape
    ncols = wb_cat.shape[1]
    rows = np.arange(S_PAD)[:, None]
    cols = np.arange(ncols)[None, :]
    row_bin = ((rows >= row_offsets[0]).astype(np.int32)
               + (rows >= row_offsets[1]) + (rows >= row_offsets[2])
               + (rows >= row_offsets[3]))
    col_bin = cols // rd
    keep = jnp.asarray(row_bin == col_bin)

    def one(x):
        pooled = jnp.dot(p_all, x.astype(f32), preferred_element_type=f32)
        z = jnp.dot(pooled.astype(jnp.bfloat16), wb_cat,
                    preferred_element_type=f32) + sh_cat
        z = jnp.where(keep, jnp.maximum(z, 0.0), 0.0)
        y = jnp.dot(z.astype(jnp.bfloat16), wfb_s,
                    preferred_element_type=f32).astype(jnp.bfloat16)
        acc = jnp.dot(x, wfx, preferred_element_type=f32)
        acc = acc + jnp.dot(u_all, y, preferred_element_type=f32)
        return jnp.maximum(acc + shf, 0.0).astype(jnp.bfloat16)

    return jax.vmap(one)(xb)


# --------------------------------------------------------------------------
if __name__ == "__main__":
    # Small but lane-dense shapes: 128 channels -> full 128-lane vregs;
    # HW = 1024 -> 8 HW tiles of 128 rows, so grid (2, 8) gives the pipeline
    # plenty of steps on a single TC and >=2 steps per core under megacore.
    N, C_IN, H, W = 2, 128, 32, 32
    OUT_DIM = 128
    RD = C_IN // N_BINS                        # reduction_dim
    C_TOTAL = C_IN + RD * N_BINS
    HW = H * W
    TILE_HW = 128
    S = sum(b * b for b in BINS)               # 50 real stacked pyramid rows
    S_PAD = 128                                # lane-dense padding of the stack

    key = jax.random.PRNGKey(0)
    ki = iter(jax.random.split(key, 32))

    # Input in PyTorch NCHW convention, flattened NHWC for the kernel.
    x_nchw = jax.random.normal(next(ki), (N, C_IN, H, W), jnp.float32)
    x_flat = jnp.transpose(x_nchw, (0, 2, 3, 1)).reshape(N, HW, C_IN)
    x_bf = x_flat.astype(jnp.bfloat16)

    # ---- per-bin parameters + stacked pyramid operators --------------------
    offsets = np.cumsum([0] + [b * b for b in BINS])
    row_offsets = tuple(int(v) for v in offsets[1:])                  # (1,5,14,50)
    P_all_np = np.zeros((S_PAD, HW), np.float32)
    U_all_np = np.zeros((HW, S_PAD), np.float32)

    axis_mats, bin_weights = [], []            # for the literal f32 reference
    wb_fold_blocks, sh_blocks = [], []
    for i, b in enumerate(BINS):
        Ph = adaptive_pool_matrix(b, H)
        Pw = adaptive_pool_matrix(b, W)
        Uh = bilinear_upsample_matrix(H, b)
        Uw = bilinear_upsample_matrix(W, b)
        P_all_np[offsets[i]:offsets[i + 1]] = np.kron(Ph, Pw)          # (b*b, HW)
        U_all_np[:, offsets[i]:offsets[i + 1]] = np.kron(Uh, Uw)       # (HW, b*b)

        Wb = 0.3 * jax.random.normal(next(ki), (C_IN, RD), jnp.float32)
        gamma = 1.0 + 0.1 * jax.random.normal(next(ki), (RD,), jnp.float32)
        beta = 0.1 * jax.random.normal(next(ki), (RD,), jnp.float32)
        mean = 0.1 * jax.random.normal(next(ki), (RD,), jnp.float32)
        var = jax.random.uniform(next(ki), (RD,), jnp.float32, minval=0.5, maxval=1.5)
        sc, sh = fold_bn(gamma, beta, mean, var)

        wb_fold_blocks.append(Wb * sc)                                 # fold BN scale
        sh_blocks.append(sh)
        axis_mats.append((jnp.asarray(Ph), jnp.asarray(Pw), jnp.asarray(Uh), jnp.asarray(Uw)))
        bin_weights.append((Wb, sc, sh))

    wb_cat = jnp.concatenate(wb_fold_blocks, axis=1)                   # (Cin, 4*Rd)
    sh_cat = jnp.concatenate(sh_blocks, axis=1)                        # (1, 4*Rd)

    # ---- final 1x1 conv + BN (scale folded into the weights) ---------------
    wf_full = 0.3 * jax.random.normal(next(ki), (C_TOTAL, OUT_DIM), jnp.float32)
    gamma_f = 1.0 + 0.1 * jax.random.normal(next(ki), (OUT_DIM,), jnp.float32)
    beta_f = 0.1 * jax.random.normal(next(ki), (OUT_DIM,), jnp.float32)
    mean_f = 0.1 * jax.random.normal(next(ki), (OUT_DIM,), jnp.float32)
    var_f = jax.random.uniform(next(ki), (OUT_DIM,), jnp.float32, minval=0.5, maxval=1.5)
    scf, shf = fold_bn(gamma_f, beta_f, mean_f, var_f)
    wf_fold = wf_full * scf                                            # (Ctotal, OUT)
    wfx = wf_fold[:C_IN]                                               # identity block
    wfb_s = wf_fold[C_IN:]                                             # stacked pyramid block

    # Operand dtypes: p_all stays f32 (exact 1/window pooling weights),
    # everything else bf16; f32 accumulation inside the kernels.
    p_all_f32 = jnp.asarray(P_all_np, jnp.float32)
    u_all_bf = jnp.asarray(U_all_np, jnp.bfloat16)
    wfx_bf = wfx.astype(jnp.bfloat16)
    wb_cat_bf = wb_cat.astype(jnp.bfloat16)
    wfb_bf = wfb_s.astype(jnp.bfloat16)
    sh_cat_f32 = sh_cat.astype(jnp.float32)
    shf_f32 = shf.astype(jnp.float32)

    # ---- run Pallas kernels -------------------------------------------------
    out = adaptive_pyramid_pooling(x_bf, p_all_f32, u_all_bf, wfx_bf, wb_cat_bf,
                                   sh_cat_f32, wfb_bf, shf_f32,
                                   rd=RD, row_offsets=row_offsets,
                                   tile_hw=TILE_HW, out_dtype=jnp.bfloat16)
    out = jax.block_until_ready(out)
    out_f32 = np.asarray(out, np.float32)

    # ---- checks -------------------------------------------------------------
    # (1) tight: kernel vs identical folded/stacked bf16 math in plain jnp
    ref_m = matched_reference(x_bf, p_all_f32, u_all_bf, wfx_bf, wb_cat_bf,
                              sh_cat_f32, wfb_bf, shf_f32, RD, row_offsets)
    np.testing.assert_allclose(out_f32, np.asarray(ref_m, np.float32),
                               atol=1e-1, rtol=2e-2)

    # (2) semantics: kernel vs literal f32 PSPNet module math (loose tolerance
    #     accounts for bf16 operand + bf16 output rounding only).
    ref_f32 = reference_forward(x_nchw, axis_mats, bin_weights, wf_full, scf, shf)
    np.testing.assert_allclose(out_f32, np.asarray(ref_f32),
                               atol=2.5e-1, rtol=1e-1)

    print("KERNEL_OK")
</pallas_src>

<mosaic_0001>
module attributes {stable_mosaic.version = 11 : i64} {
  func.func @kernel(%arg0: i32, %arg1: i32, %arg2: memref<1x128x128xbf16, #tpu.memory_space<vmem>>, %arg3: memref<128x128xf32, #tpu.memory_space<vmem>>, %arg4: memref<128x128xbf16, #tpu.memory_space<vmem>>, %arg5: memref<1x128xf32, #tpu.memory_space<vmem>>, %arg6: memref<128x128xbf16, #tpu.memory_space<vmem>>, %arg7: memref<1x128x128xbf16, #tpu.memory_space<vmem>>, %arg8: memref<128x128xf32, #tpu.memory_space<vmem>>) attributes {dimension_semantics = [#tpu.dimension_semantics<parallel>, #tpu.dimension_semantics<arbitrary>], iteration_bounds = array<i64: 2, 8>, scalar_prefetch = 0 : i64, scratch_operands = 1 : i64, tpu.core_type = #tpu.core_type<tc>, window_params = [{transform_indices = @transform_0, window_bounds = array<i64: 1, 128, 128>}, {transform_indices = @transform_1, window_bounds = array<i64: 128, 128>}, {pipeline_mode = #tpu.pipeline_mode<synchronous>, transform_indices = @transform_2, window_bounds = array<i64: 128, 128>}, {pipeline_mode = #tpu.pipeline_mode<synchronous>, transform_indices = @transform_3, window_bounds = array<i64: 1, 128>}, {pipeline_mode = #tpu.pipeline_mode<synchronous>, transform_indices = @transform_4, window_bounds = array<i64: 128, 128>}, {transform_indices = @transform_5, window_bounds = array<i64: 1, 128, 128>}]} {
    %c0_i32 = arith.constant 0 : i32
    %0 = arith.cmpi eq, %arg1, %c0_i32 : i32
    %1 = arith.extui %0 : i1 to i32
    %c0_i32_0 = arith.constant 0 : i32
    %2 = arith.cmpi ne, %1, %c0_i32_0 : i32
    scf.if %2 {
      %cst_10 = arith.constant 0.000000e+00 : f32
      %14 = vector.broadcast %cst_10 : f32 to vector<128x128xf32>
      %c0_11 = arith.constant 0 : index
      %c0_12 = arith.constant 0 : index
      %15 = vector.load %arg8[%c0_11, %c0_12] : memref<128x128xf32, #tpu.memory_space<vmem>>, vector<128x128xf32>
      tpu.vector_store %arg8[%c0_11, %c0_12], %14 {strides = array<i32>} : memref<128x128xf32, #tpu.memory_space<vmem>>, vector<128x128xf32>,
    } else {
    }
    %c0 = arith.constant 0 : index
    %c0_1 = arith.constant 0 : index
    %3 = vector.load %arg8[%c0, %c0_1] : memref<128x128xf32, #tpu.memory_space<vmem>>, vector<128x128xf32>
    %c0_2 = arith.constant 0 : index
    %c0_3 = arith.constant 0 : index
    %4 = vector.load %arg3[%c0_2, %c0_3] : memref<128x128xf32, #tpu.memory_space<vmem>>, vector<128x128xf32>
    %c0_4 = arith.constant 0 : index
    %c0_5 = arith.constant 0 : index
    %c0_6 = arith.constant 0 : index
    %5 = vector.load %arg2[%c0_4, %c0_5, %c0_6] : memref<1x128x128xbf16, #tpu.memory_space<vmem>>, vector<1x128x128xbf16>
    %6 = vector.shape_cast %5 : vector<1x128x128xbf16> to vector<128x128xbf16>
    %7 = arith.extf %6 : vector<128x128xbf16> to vector<128x128xf32>
    %cst = arith.constant dense<0.000000e+00> : vector<128x128xf32>
    %8 = tpu.matmul %4, %7, %cst {dimension_numbers = #tpu.dot_dimension_numbers<[1], [0], [0], [1], [0, 0, 1, 1], [], []>} : vector<128x128xf32>, vector<128x128xf32>, vector<128x128xf32> -> vector<128x128xf32>
    %9 = arith.addf %3, %8 : vector<128x128xf32>
    %c0_7 = arith.constant 0 : index
    %c0_8 = arith.constant 0 : index
    %10 = vector.load %arg8[%c0_7, %c0_8] : memref<128x128xf32, #tpu.memory_space<vmem>>, vector<128x128xf32>
    tpu.vector_store %arg8[%c0_7, %c0_8], %9 {strides = array<i32>} : memref<128x128xf32, #tpu.memory_space<vmem>>, vector<128x128xf32>,
    %c7_i32 = arith.constant 7 : i32
    %11 = arith.cmpi eq, %arg1, %c7_i32 : i32
    %12 = arith.extui %11 : i1 to i32
    %c0_i32_9 = arith.constant 0 : i32
    %13 = arith.cmpi ne, %12, %c0_i32_9 : i32
    scf.if %13 {
      %c0_10 = arith.constant 0 : index
      %c0_11 = arith.constant 0 : index
      %14 = vector.load %arg8[%c0_10, %c0_11] : memref<128x128xf32, #tpu.memory_space<vmem>>, vector<128x128xf32>
      %15 = arith.truncf %14 : vector<128x128xf32> to vector<128x128xbf16>
      %c0_12 = arith.constant 0 : index
      %c0_13 = arith.constant 0 : index
      %16 = vector.load %arg4[%c0_12, %c0_13] : memref<128x128xbf16, #tpu.memory_space<vmem>>, vector<128x128xbf16>
      %cst_14 = arith.constant dense<0.000000e+00> : vector<128x128xf32>
      %17 = tpu.matmul %15, %16, %cst_14 {dimension_numbers = #tpu.dot_dimension_numbers<[1], [0], [0], [1], [0, 0, 1, 1], [], []>} : vector<128x128xbf16>, vector<128x128xbf16>, vector<128x128xf32> -> vector<128x128xf32>
      %c0_15 = arith.constant 0 : index
      %c0_16 = arith.constant 0 : index
      %18 = vector.load %arg5[%c0_15, %c0_16] : memref<1x128xf32, #tpu.memory_space<vmem>>, vector<1x128xf32>
      %19 = vector.broadcast %18 : vector<1x128xf32> to vector<128x128xf32>
      %20 = arith.addf %17, %19 : vector<128x128xf32>
      %21 = tpu.iota {dimensions = array<i32: 0>} : vector<128x128xi32>
      %22 = tpu.iota {dimensions = array<i32: 1>} : vector<128x128xi32>
      %c1_i32 = arith.constant 1 : i32
      %23 = vector.broadcast %c1_i32 : i32 to vector<128x128xi32>
      %24 = arith.cmpi sge, %21, %23 : vector<128x128xi32>
      %25 = arith.extui %24 : vector<128x128xi1> to vector<128x128xi32>
      %c5_i32 = arith.constant 5 : i32
      %26 = vector.broadcast %c5_i32 : i32 to vector<128x128xi32>
      %27 = arith.cmpi sge, %21, %26 : vector<128x128xi32>
      %28 = arith.extui %27 : vector<128x128xi1> to vector<128x128xi32>
      %29 = arith.addi %25, %28 : vector<128x128xi32>
      %c14_i32 = arith.constant 14 : i32
      %30 = vector.broadcast %c14_i32 : i32 to vector<128x128xi32>
      %31 = arith.cmpi sge, %21, %30 : vector<128x128xi32>
      %32 = arith.extui %31 : vector<128x128xi1> to vector<128x128xi32>
      %33 = arith.addi %29, %32 : vector<128x128xi32>
      %c50_i32 = arith.constant 50 : i32
      %34 = vector.broadcast %c50_i32 : i32 to vector<128x128xi32>
      %35 = arith.cmpi sge, %21, %34 : vector<128x128xi32>
      %36 = arith.extui %35 : vector<128x128xi1> to vector<128x128xi32>
      %37 = arith.addi %33, %36 : vector<128x128xi32>
      %c32_i32 = arith.constant 32 : i32
      %38 = vector.broadcast %c32_i32 : i32 to vector<128x128xi32>
      %39 = arith.cmpi sge, %22, %38 : vector<128x128xi32>
      %40 = arith.extui %39 : vector<128x128xi1> to vector<128x128xi32>
      %c64_i32 = arith.constant 64 : i32
      %41 = vector.broadcast %c64_i32 : i32 to vector<128x128xi32>
      %42 = arith.cmpi sge, %22, %41 : vector<128x128xi32>
      %43 = arith.extui %42 : vector<128x128xi1> to vector<128x128xi32>
      %44 = arith.addi %40, %43 : vector<128x128xi32>
      %c96_i32 = arith.constant 96 : i32
      %45 = vector.broadcast %c96_i32 : i32 to vector<128x128xi32>
      %46 = arith.cmpi sge, %22, %45 : vector<128x128xi32>
      %47 = arith.extui %46 : vector<128x128xi1> to vector<128x128xi32>
      %48 = arith.addi %44, %47 : vector<128x128xi32>
      %49 = arith.cmpi eq, %37, %48 : vector<128x128xi32>
      %cst_17 = arith.constant 0.000000e+00 : f32
      %50 = vector.broadcast %cst_17 : f32 to vector<128x128xf32>
      %51 = arith.maximumf %20, %50 : vector<128x128xf32>
      %cst_18 = arith.constant 0.000000e+00 : f32
      %52 = vector.broadcast %cst_18 : f32 to vector<128x128xf32>
      %53 = arith.select %49, %51, %52 : vector<128x128xi1>, vector<128x128xf32>
      %54 = arith.truncf %53 : vector<128x128xf32> to vector<128x128xbf16>
      %c0_19 = arith.constant 0 : index
      %c0_20 = arith.constant 0 : index
      %55 = vector.load %arg6[%c0_19, %c0_20] : memref<128x128xbf16, #tpu.memory_space<vmem>>, vector<128x128xbf16>
      %cst_21 = arith.constant dense<0.000000e+00> : vector<128x128xf32>
      %56 = tpu.matmul %54, %55, %cst_21 {dimension_numbers = #tpu.dot_dimension_numbers<[1], [0], [0], [1], [0, 0, 1, 1], [], []>} : vector<128x128xbf16>, vector<128x128xbf16>, vector<128x128xf32> -> vector<128x128xf32>
      %57 = arith.truncf %56 : vector<128x128xf32> to vector<128x128xbf16>
      %c0_22 = arith.constant 0 : index
      %c0_23 = arith.constant 0 : index
      %c0_24 = arith.constant 0 : index
      %58 = vector.load %arg7[%c0_22, %c0_23, %c0_24] : memref<1x128x128xbf16, #tpu.memory_space<vmem>>, vector<1x128x128xbf16>
      %59 = vector.shape_cast %58 : vector<1x128x128xbf16> to vector<128x128xbf16>
      %60 = vector.shape_cast %57 : vector<128x128xbf16> to vector<1x128x128xbf16>
      tpu.vector_store %arg7[%c0_22, %c0_23, %c0_24], %60 {strides = array<i32>} : memref<1x128x128xbf16, #tpu.memory_space<vmem>>, vector<1x128x128xbf16>,
    } else {
    }
    return
  }
  func.func @transform_0(%arg0: i32, %arg1: i32) -> (i32, i32, i32) {
    %c0_i32 = arith.constant 0 : i32
    %c0_i32_0 = arith.constant 0 : i32
    return %arg0, %arg1, %c0_i32 : i32, i32, i32
  }
  func.func @transform_1(%arg0: i32, %arg1: i32) -> (i32, i32) {
    %c0_i32 = arith.constant 0 : i32
    %c0_i32_0 = arith.constant 0 : i32
    return %c0_i32, %arg1 : i32, i32
  }
  func.func @transform_2(%arg0: i32, %arg1: i32) -> (i32, i32) {
    %c0_i32 = arith.constant 0 : i32
    %c0_i32_0 = arith.constant 0 : i32
    %c0_i32_1 = arith.constant 0 : i32
    return %c0_i32, %c0_i32_0 : i32, i32
  }
  func.func @transform_3(%arg0: i32, %arg1: i32) -> (i32, i32) {
    %c0_i32 = arith.constant 0 : i32
    %c0_i32_0 = arith.constant 0 : i32
    %c0_i32_1 = arith.constant 0 : i32
    return %c0_i32, %c0_i32_0 : i32, i32
  }
  func.func @transform_4(%arg0: i32, %arg1: i32) -> (i32, i32) {
    %c0_i32 = arith.constant 0 : i32
    %c0_i32_0 = arith.constant 0 : i32
    %c0_i32_1 = arith.constant 0 : i32
    return %c0_i32, %c0_i32_0 : i32, i32
  }
  func.func @transform_5(%arg0: i32, %arg1: i32) -> (i32, i32, i32) {
    %c0_i32 = arith.constant 0 : i32
    %c0_i32_0 = arith.constant 0 : i32
    %c0_i32_1 = arith.constant 0 : i32
    return %arg0, %c0_i32, %c0_i32_0 : i32, i32, i32
  }
}

</mosaic_0001>

<llo_original>
// kernel: tpu_custom_call.1
$region0: #{tpu_custom_call.1}
  #allocation0 [shape = 'u32[]', space=smem, size = 0x4, offset = 0x4, fixed_abs, tag = 'smem constant byte address 0x4 - core index']
  #allocation1 [shape = 'u32[144,128]{1,0:T(1,128)}', space=vmem, size = 0x12000, scoped, tag = 'internal scratch']
  #allocation2 [shape = 'f32[128,128]{1,0:T(8,128)}', space=vmem, size = 0x10000, scoped, tag = 'scratch operand']
  %s0 = inlined_call_operand.hbm [shape: bf16[2,1024,128], index: 0, kind: input, shape index: {}]
  %s1 = inlined_call_operand.hbm [shape: f32[128,1024], index: 1, kind: input, shape index: {}]
  %s2 = inlined_call_operand.hbm [shape: bf16[128,128], index: 2, kind: input, shape index: {}]
  %s3 = inlined_call_operand.vmem [shape: f32[1,128], index: 3, kind: input, shape index: {}]
  %s4 = inlined_call_operand.hbm [shape: bf16[128,128], index: 4, kind: input, shape index: {}]
  %s5 = inlined_call_operand.hbm [shape: bf16[2,128,128], index: 5, kind: output, shape index: {}]
  %s6 = sld [smem:[#allocation0]]
  $region77: #{tpu_custom_call.1} parent=0
    _
  %s8 = ssub.s32 1, %s6
  %s9 = scalar_select 0, %s8, %s6
  $region1: #{tpu_custom_call.1} parent=0
    #allocation3 [shape = 'u8[65536]{0}', space=vmem, size = 0x10000, scoped, tag = 'input window, operand 0']
    #allocation4 [shape = 's32[2]{0}', space=sflag, size = 0x8, scoped, tag = 'scoped memory for tpu_custom_call.1']
    #allocation5 [shape = 's32[2]{0}', space=sflag, size = 0x8, scoped, tag = 'scoped memory for tpu_custom_call.1']
    #allocation6 [shape = 'u8[131072]{0}', space=vmem, size = 0x20000, scoped, tag = 'input window, operand 1']
    #allocation7 [shape = 's32[2]{0}', space=sflag, size = 0x8, scoped, tag = 'scoped memory for tpu_custom_call.1']
    #allocation8 [shape = 'u8[32768]{0}', space=vmem, size = 0x8000, scoped, tag = 'input window, operand 2, single buffered']
    #allocation9 [shape = 'u8[32768]{0}', space=vmem, size = 0x8000, scoped, tag = 'input window, operand 4, single buffered']
    #allocation10 [shape = 's32[1]{0}', space=sflag, size = 0x4, scoped, tag = 'scoped memory for tpu_custom_call.1']
    #allocation11 [shape = 'u8[65536]{0}', space=vmem, size = 0x10000, scoped, tag = 'output window, operand 0']
    %10 = vsyncpa [#allocation4], 0
    %s11 = scalar_lea.sflag [#allocation4], 1
    %12 = vsyncpa %s11, 0
    %13 = vsyncpa [#allocation7], 0
    %s14 = scalar_lea.sflag [#allocation7], 1
    %15 = vsyncpa %s14, 0
    %16 = vsyncpa [#allocation10], 0
    %17 = vsyncpa [#allocation5], 0
    %s18 = scalar_lea.sflag [#allocation5], 1
    %19 = vsyncpa %s18, 0
    loop: start=0, step=1, limit=18
    $region2: #{tpu_custom_call.1} parent=1 // loop_pre_header
      _
    $region3: #{tpu_custom_call.1} parent=1 // loop_header
      %s21 = sphi 0, %s25
      %p22 = scmp.ge.s32.totalorder %s21, 18
      %s28 = sphi 0, %s40
      %s29 = sphi 0, %s36
      %s30 = sphi 0, %s28
      %s31 = sphi 0, %s29
      %s32 = sphi 0, %s30
      %s33 = sphi 0, %s31
      %s45 = sphi 0, %s47
      %s48 = sphi 0, %s45
      %s49 = sphi 0, %s48
      %s65 = sphi 0, %s49
      %s71 = sphi 0, %s73
      %s74 = sphi 0, %s71
      %s75 = sphi 0, %s74
      %s91 = sphi 0, %s75
      %s95 = sphi 0, %s95
      %s97 = sphi 0, %s95
      %s98 = sphi 0, %s97
      %s112 = sphi 0, %s98
      %s116 = sphi 0, %s116
      %s118 = sphi 0, %s116
      %s119 = sphi 0, %s118
      %s133 = sphi 0, %s119
      %s137 = sphi 0, %s137
      %s139 = sphi 0, %s137
      %s140 = sphi 0, %s139
      %s154 = sphi 0, %s140
      %s160 = sphi 0, %s162
      %s163 = sphi 0, %s160
      %s164 = sphi 0, %s163
      %s180 = sphi 0, %s164
    $region4: #{tpu_custom_call.1} parent=1 // loop_header_branch
      %24 = sbr.rel (%p22) target = $region8
    $region5: #{tpu_custom_call.1} parent=1 // loop_body
      %s26 = ssub.s32 %s21, 1
      %s27 = ssub.s32 %s21, 2
      %s34 = sadd.s32 1, %s29
      %p35 = scmp.ge.s32.totalorder %s34, 8
      %s36 = scalar_select %p35, 0, %s34
      %s37 = sadd.s32 1, %s28
      %s38 = scalar_select %p35, %s37, %s28
      %p39 = scmp.ge.s32.totalorder %s38, 2
      %s40 = scalar_select %p39, 0, %s38
      %s41 = ssub.s32 %s28, %s40
      %s42 = ssub.s32 %s29, %s36
      %s43 = sor.u32 %s41, %s42
      %p44 = scmp.eq.s32.totalorder %s43, 0
      %s46 = sadd.s32 %s45, 1
      %s47 = scalar_select %p44, %s45, %s46
      %p50 = pneg %p44
      %p51 = scmp.eq.s32.totalorder %s21, 15
      %p52 = por %p50, %p51
      %p53 = scmp.ne.s32.totalorder %s45, %s48
      %p54 = scmp.eq.s32.totalorder %s21, 0
      %p55 = por %p53, %p54
      %p56 = scmp.ne.s32.totalorder %s45, %s48
      %p57 = scmp.eq.s32.totalorder %s26, 15
      %p58 = por %p56, %p57
      %p59 = scmp.ne.s32.totalorder %s48, %s49
      %p60 = scmp.eq.s32.totalorder %s26, 0
      %p61 = por %p59, %p60
      %p62 = scmp.ne.s32.totalorder %s48, %s49
      %p63 = scmp.eq.s32.totalorder %s27, 15
      %p64 = por %p62, %p63
      %p66 = scmp.ne.s32.totalorder %s49, %s65
      %p67 = scmp.eq.s32.totalorder %s27, 0
      %p68 = por %p66, %p67
      %s69 = ssub.s32 %s29, %s36
      %p70 = scmp.eq.s32.totalorder %s69, 0
      %s72 = sadd.s32 %s71, 1
      %s73 = scalar_select %p70, %s71, %s72
      %p76 = pneg %p70
      %p77 = scmp.eq.s32.totalorder %s21, 15
      %p78 = por %p76, %p77
      %p79 = scmp.ne.s32.totalorder %s71, %s74
      %p80 = scmp.eq.s32.totalorder %s21, 0
      %p81 = por %p79, %p80
      %p82 = scmp.ne.s32.totalorder %s71, %s74
      %p83 = scmp.eq.s32.totalorder %s26, 15
      %p84 = por %p82, %p83
      %p85 = scmp.ne.s32.totalorder %s74, %s75
      %p86 = scmp.eq.s32.totalorder %s26, 0
      %p87 = por %p85, %p86
      %p88 = scmp.ne.s32.totalorder %s74, %s75
      %p89 = scmp.eq.s32.totalorder %s27, 15
      %p90 = por %p88, %p89
      %p92 = scmp.ne.s32.totalorder %s75, %s91
      %p93 = scmp.eq.s32.totalorder %s27, 0
      %p94 = por %p92, %p93
      %s96 = sadd.s32 %s95, 1
      %p99 = scmp.eq.s32.totalorder %s21, 15
      %p100 = scmp.ne.s32.totalorder %s95, %s97
      %p101 = scmp.eq.s32.totalorder %s21, 0
      %p102 = por %p100, %p101
      %p103 = scmp.ne.s32.totalorder %s95, %s97
      %p104 = scmp.eq.s32.totalorder %s26, 15
      %p105 = por %p103, %p104
      %p106 = scmp.ne.s32.totalorder %s97, %s98
      %p107 = scmp.eq.s32.totalorder %s26, 0
      %p108 = por %p106, %p107
      %p109 = scmp.ne.s32.totalorder %s97, %s98
      %p110 = scmp.eq.s32.totalorder %s27, 15
      %p111 = por %p109, %p110
      %p113 = scmp.ne.s32.totalorder %s98, %s112
      %p114 = scmp.eq.s32.totalorder %s27, 0
      %p115 = por %p113, %p114
      %s117 = sadd.s32 %s116, 1
      %p120 = scmp.eq.s32.totalorder %s21, 15
      %p121 = scmp.ne.s32.totalorder %s116, %s118
      %p122 = scmp.eq.s32.totalorder %s21, 0
      %p123 = por %p121, %p122
      %p124 = scmp.ne.s32.totalorder %s116, %s118
      %p125 = scmp.eq.s32.totalorder %s26, 15
      %p126 = por %p124, %p125
      %p127 = scmp.ne.s32.totalorder %s118, %s119
      %p128 = scmp.eq.s32.totalorder %s26, 0
      %p129 = por %p127, %p128
      %p130 = scmp.ne.s32.totalorder %s118, %s119
      %p131 = scmp.eq.s32.totalorder %s27, 15
      %p132 = por %p130, %p131
      %p134 = scmp.ne.s32.totalorder %s119, %s133
      %p135 = scmp.eq.s32.totalorder %s27, 0
      %p136 = por %p134, %p135
      %s138 = sadd.s32 %s137, 1
      %p141 = scmp.eq.s32.totalorder %s21, 15
      %p142 = scmp.ne.s32.totalorder %s137, %s139
      %p143 = scmp.eq.s32.totalorder %s21, 0
      %p144 = por %p142, %p143
      %p145 = scmp.ne.s32.totalorder %s137, %s139
      %p146 = scmp.eq.s32.totalorder %s26, 15
      %p147 = por %p145, %p146
      %p148 = scmp.ne.s32.totalorder %s139, %s140
      %p149 = scmp.eq.s32.totalorder %s26, 0
      %p150 = por %p148, %p149
      %p151 = scmp.ne.s32.totalorder %s139, %s140
      %p152 = scmp.eq.s32.totalorder %s27, 15
      %p153 = por %p151, %p152
      %p155 = scmp.ne.s32.totalorder %s140, %s154
      %p156 = scmp.eq.s32.totalorder %s27, 0
      %p157 = por %p155, %p156
      %s158 = ssub.s32 %s28, %s40
      %p159 = scmp.eq.s32.totalorder %s158, 0
      %s161 = sadd.s32 %s160, 1
      %s162 = scalar_select %p159, %s160, %s161
      %p165 = pneg %p159
      %p166 = scmp.eq.s32.totalorder %s21, 15
      %p167 = por %p165, %p166
      %p168 = scmp.ne.s32.totalorder %s160, %s163
      %p169 = scmp.eq.s32.totalorder %s21, 0
      %p170 = por %p168, %p169
      %p171 = scmp.ne.s32.totalorder %s160, %s163
      %p172 = scmp.eq.s32.totalorder %s26, 15
      %p173 = por %p171, %p172
      %p174 = scmp.ne.s32.totalorder %s163, %s164
      %p175 = scmp.eq.s32.totalorder %s26, 0
      %p176 = por %p174, %p175
      %p177 = scmp.ne.s32.totalorder %s163, %s164
      %p178 = scmp.eq.s32.totalorder %s27, 15
      %p179 = por %p177, %p178
      %p181 = scmp.ne.s32.totalorder %s164, %s180
      %p182 = scmp.eq.s32.totalorder %s27, 0
      %p183 = por %p181, %p182
      %p184 = scmp.le.s32.totalorder 1, %s21
      %p185 = scmp.lt.s32.totalorder %s21, 17
      %p186 = pnand %p184, %p185
      %p187 = pneg %p186
      // Predicated region
      $region9: #{tpu_custom_call.1} parent=5 // pred_check
        _
      $region10: #{tpu_custom_call.1} parent=5 // pred_check_branch
        %189 = sbr.rel (%p186) target = $region12
      $region11: #{tpu_custom_call.1} parent=5 // pred_region
        %s190 = ssub.s32 %s21, 1
        // Predicated region
        $region13: #{tpu_custom_call.1} parent=11 // pred_check
          %p191 = pneg %p108
        $region14: #{tpu_custom_call.1} parent=11 // pred_check_branch
          %193 = sbr.rel (%p191) target = $region16
        $region15: #{tpu_custom_call.1} parent=11 // pred_region
          %s195 = ssub.s32 1024, 1024
          %196 = vsyncadd [#allocation7], %s195
          %s197 = sshll.u32 [#allocation8], 4
          %s198 = int_to_ptr.vmem [resolvable:$true] %s197
          %203 = dma.hbm_to_vmem [thread:$0]  %s2, 1024, %s198, [#allocation7], 64, 64, 4
        $region16: #{tpu_custom_call.1} parent=11 // pred_fallthru
          _
        // Predicated region
        $region17: #{tpu_custom_call.1} parent=11 // pred_check
          %p204 = pneg %p129
        $region18: #{tpu_custom_call.1} parent=11 // pred_check_branch
          %206 = sbr.rel (%p204) target = $region20
        $region19: #{tpu_custom_call.1} parent=11 // pred_region
          _
        $region20: #{tpu_custom_call.1} parent=11 // pred_fallthru
          _
        // Predicated region
        $region21: #{tpu_custom_call.1} parent=11 // pred_check
          %p207 = pneg %p150
        $region22: #{tpu_custom_call.1} parent=11 // pred_check_branch
          %209 = sbr.rel (%p207) target = $region24
        $region23: #{tpu_custom_call.1} parent=11 // pred_region
          %s211 = ssub.s32 1024, 1024
          %212 = vsyncadd [#allocation10], %s211
          %s213 = sshll.u32 [#allocation9], 4
          %s214 = int_to_ptr.vmem [resolvable:$true] %s213
          %219 = dma.hbm_to_vmem [thread:$0]  %s4, 1024, %s214, [#allocation10], 64, 64, 4
        $region24: #{tpu_custom_call.1} parent=11 // pred_fallthru
          _
      $region12: #{tpu_custom_call.1} parent=5 // pred_fallthru
        _
      %p220 = scmp.lt.s32.totalorder %s21, 16
      // Predicated region
      $region25: #{tpu_custom_call.1} parent=5 // pred_check
        %p221 = pneg %p220
      $region26: #{tpu_custom_call.1} parent=5 // pred_check_branch
        %223 = sbr.rel (%p221) target = $region28
      $region27: #{tpu_custom_call.1} parent=5 // pred_region
        // Predicated region
        $region29: #{tpu_custom_call.1} parent=27 // pred_check
          %p224 = pneg %p55
        $region30: #{tpu_custom_call.1} parent=27 // pred_check_branch
          %226 = sbr.rel (%p224) target = $region32
        $region31: #{tpu_custom_call.1} parent=27 // pred_region
          %s227 = sand.u32 %s45, 1
          %s228 = scalar_lea.sflag [#allocation4], %s227
          %s229 = sand.u32 %s45, 1
          %s230 = smul.addr %s229, 64
          %s231 = scalar_lea.vmem [#allocation3], %s230
          %s232 = smul.u32 16, %s29
          %s234 = ssub.s32 1024, 1024
          %235 = vsyncadd %s228, %s234
          %s236 = smul.addr %s28, 128
          %s237 = sadd.s32 %s232, %s236
          %s238 = smul.addr %s237, 64
          %s239 = scalar_lea.hbm %s0, %s238
          %s240 = sshll.u32 %s231, 4
          %s241 = int_to_ptr.vmem [resolvable:$true] %s240
          %246 = dma.hbm_to_vmem [thread:$0]  %s239, 1024, %s241, %s228, 64, 64, 4
        $region32: #{tpu_custom_call.1} parent=27 // pred_fallthru
          _
        // Predicated region
        $region33: #{tpu_custom_call.1} parent=27 // pred_check
          %p247 = pneg %p81
        $region34: #{tpu_custom_call.1} parent=27 // pred_check_branch
          %249 = sbr.rel (%p247) target = $region36
        $region35: #{tpu_custom_call.1} parent=27 // pred_region
          %s250 = sand.u32 %s21, 1
          %s251 = scalar_lea.sflag [#allocation7], %s250
          %s252 = sand.u32 %s71, 1
          %s253 = smul.addr %s252, 128
          %s254 = scalar_lea.vmem [#allocation6], %s253
          %s256 = ssub.s32 2048, 2048
          %257 = vsyncadd %s251, %s256
          %s258 = smul.addr %s29, 128
          %s259 = scalar_lea.hbm %s1, %s258
          %s260 = sshll.u32 %s254, 4
          %s261 = int_to_ptr.vmem [resolvable:$true] %s260
          %266 = dma.hbm_to_vmem [thread:$0]  %s259, 2048, %s261, %s251, 1024, 128, 8
        $region36: #{tpu_custom_call.1} parent=27 // pred_fallthru
          _
      $region28: #{tpu_custom_call.1} parent=5 // pred_fallthru
        _
      %p267 = scmp.le.s32.totalorder 1, %s21
      %p268 = scmp.lt.s32.totalorder %s21, 17
      %p269 = pnand %p267, %p268
      %p270 = pneg %p269
      // Predicated region
      $region37: #{tpu_custom_call.1} parent=5 // pred_check
        _
      $region38: #{tpu_custom_call.1} parent=5 // pred_check_branch
        %272 = sbr.rel (%p269) target = $region40
      $region39: #{tpu_custom_call.1} parent=5 // pred_region
        %s273 = ssub.s32 %s21, 1
        %s274 = sand.u32 %s48, 1
        %s275 = scalar_lea.sflag [#allocation4], %s274
        %s276 = sand.u32 %s48, 1
        %s277 = smul.addr %s276, 64
        %s278 = scalar_lea.vmem [#allocation3], %s277
        // Predicated region
        $region41: #{tpu_custom_call.1} parent=39 // pred_check
          %p279 = pneg %p61
        $region42: #{tpu_custom_call.1} parent=39 // pred_check_branch
          %281 = sbr.rel (%p279) target = $region44
        $region43: #{tpu_custom_call.1} parent=39 // pred_region
          %282 = dma.done %s275, 1024
        $region44: #{tpu_custom_call.1} parent=39 // pred_fallthru
          _
        %s283 = sand.u32 %s26, 1
        %s284 = scalar_lea.sflag [#allocation7], %s283
        %s285 = sand.u32 %s74, 1
        %s286 = smul.addr %s285, 128
        %s287 = scalar_lea.vmem [#allocation6], %s286
        // Predicated region
        $region45: #{tpu_custom_call.1} parent=39 // pred_check
          %p288 = pneg %p87
        $region46: #{tpu_custom_call.1} parent=39 // pred_check_branch
          %290 = sbr.rel (%p288) target = $region48
        $region47: #{tpu_custom_call.1} parent=39 // pred_region
          %291 = dma.done %s284, 2048
        $region48: #{tpu_custom_call.1} parent=39 // pred_fallthru
          _
        // Predicated region
        $region49: #{tpu_custom_call.1} parent=39 // pred_check
          %p292 = pneg %p108
        $region50: #{tpu_custom_call.1} parent=39 // pred_check_branch
          %294 = sbr.rel (%p292) target = $region52
        $region51: #{tpu_custom_call.1} parent=39 // pred_region
          %295 = dma.done [#allocation7], 1024
        $region52: #{tpu_custom_call.1} parent=39 // pred_fallthru
          _
        // Predicated region
        $region53: #{tpu_custom_call.1} parent=39 // pred_check
          %p296 = pneg %p150
        $region54: #{tpu_custom_call.1} parent=39 // pred_check_branch
          %298 = sbr.rel (%p296) target = $region56
        $region55: #{tpu_custom_call.1} parent=39 // pred_region
          %299 = dma.done [#allocation10], 1024
        $region56: #{tpu_custom_call.1} parent=39 // pred_fallthru
          _
        %s300 = sand.u32 %s48, 1
        %s301 = scalar_lea.sflag [#allocation4], %s300
        %s302 = sand.u32 %s48, 1
        %s303 = smul.addr %s302, 64
        %s304 = scalar_lea.vmem [#allocation3], %s303
        %p305 = pneg %p61
        %p306 = pneg %p58
        %s307 = sand.u32 %s26, 1
        %s308 = scalar_lea.sflag [#allocation7], %s307
        %s309 = sand.u32 %s74, 1
        %s310 = smul.addr %s309, 128
        %s311 = scalar_lea.vmem [#allocation6], %s310
        %p312 = pneg %p87
        %p313 = pneg %p84
        %p314 = pneg %p108
        %p315 = pneg %p105
        %p316 = pneg %p129
        %p317 = pneg %p126
        %p318 = pneg %p150
        %p319 = pneg %p147
        %p320 = pneg %p176
        %p321 = pneg %p173
        %s322 = sand.u32 %s163, 1
        %s323 = scalar_lea.sflag [#allocation5], %s322
        %s324 = sand.u32 %s163, 1
        %s325 = smul.addr %s324, 64
        %s326 = scalar_lea.vmem [#allocation11], %s325
        %s327 = smul.u32 16, %s31
        %p329 = scmp.eq.s32.totalorder %s31, 0
        // Predicated region
        $region57: #{tpu_custom_call.1} parent=39 // pred_check
          %p330 = pneg %p329
        $region58: #{tpu_custom_call.1} parent=39 // pred_check_branch
          %332 = sbr.rel (%p330) target = $region60
        $region59: #{tpu_custom_call.1} parent=39 // pred_region
          %333 = vst [vmem:[#allocation2] sm:$0xff] 0.0
          %334 = vst [vmem:[#allocation2 + $0x8] sm:$0xff] 0.0
          %335 = vst [vmem:[#allocation2 + $0x10] sm:$0xff] 0.0
          %336 = vst [vmem:[#allocation2 + $0x18] sm:$0xff] 0.0
          %337 = vst [vmem:[#allocation2 + $0x20] sm:$0xff] 0.0
          %338 = vst [vmem:[#allocation2 + $0x28] sm:$0xff] 0.0
          %339 = vst [vmem:[#allocation2 + $0x30] sm:$0xff] 0.0
          %340 = vst [vmem:[#allocation2 + $0x38] sm:$0xff] 0.0
          %341 = vst [vmem:[#allocation2 + $0x40] sm:$0xff] 0.0
          %342 = vst [vmem:[#allocation2 + $0x48] sm:$0xff] 0.0
          %343 = vst [vmem:[#allocation2 + $0x50] sm:$0xff] 0.0
          %344 = vst [vmem:[#allocation2 + $0x58] sm:$0xff] 0.0
          %345 = vst [vmem:[#allocation2 + $0x60] sm:$0xff] 0.0
          %346 = vst [vmem:[#allocation2 + $0x68] sm:$0xff] 0.0
          %347 = vst [vmem:[#allocation2 + $0x70] sm:$0xff] 0.0
          %348 = vst [vmem:[#allocation2 + $0x78] sm:$0xff] 0.0
        $region60: #{tpu_custom_call.1} parent=39 // pred_fallthru
          _
        %v349 = vld [vmem:[#allocation2] sm:$0xff]
        %v350 = vld [vmem:[#allocation2 + $0x8] sm:$0xff]
        %v351 = vld [vmem:[#allocation2 + $0x10] sm:$0xff]
        %v352 = vld [vmem:[#allocation2 + $0x18] sm:$0xff]
        %v353 = vld [vmem:[#allocation2 + $0x20] sm:$0xff]
        %v354 = vld [vmem:[#allocation2 + $0x28] sm:$0xff]
        %v355 = vld [vmem:[#allocation2 + $0x30] sm:$0xff]
        %v356 = vld [vmem:[#allocation2 + $0x38] sm:$0xff]
        %v357 = vld [vmem:[#allocation2 + $0x40] sm:$0xff]
        %v358 = vld [vmem:[#allocation2 + $0x48] sm:$0xff]
        %v359 = vld [vmem:[#allocation2 + $0x50] sm:$0xff]
        %v360 = vld [vmem:[#allocation2 + $0x58] sm:$0xff]
        %v361 = vld [vmem:[#allocation2 + $0x60] sm:$0xff]
        %v362 = vld [vmem:[#allocation2 + $0x68] sm:$0xff]
        %v363 = vld [vmem:[#allocation2 + $0x70] sm:$0xff]
        %v364 = vld [vmem:[#allocation2 + $0x78] sm:$0xff]
        %v365 = vld [vmem:[%s287] sm:$0xff]
        %v366 = vld [vmem:[%s287 + $0x8] sm:$0xff]
        %v367 = vld [vmem:[%s287 + $0x10] sm:$0xff]
        %v368 = vld [vmem:[%s287 + $0x18] sm:$0xff]
        %v369 = vld [vmem:[%s287 + $0x20] sm:$0xff]
        %v370 = vld [vmem:[%s287 + $0x28] sm:$0xff]
        %v371 = vld [vmem:[%s287 + $0x30] sm:$0xff]
        %v372 = vld [vmem:[%s287 + $0x38] sm:$0xff]
        %v373 = vld [vmem:[%s287 + $0x40] sm:$0xff]
        %v374 = vld [vmem:[%s287 + $0x48] sm:$0xff]
        %v375 = vld [vmem:[%s287 + $0x50] sm:$0xff]
        %v376 = vld [vmem:[%s287 + $0x58] sm:$0xff]
        %v377 = vld [vmem:[%s287 + $0x60] sm:$0xff]
        %v378 = vld [vmem:[%s287 + $0x68] sm:$0xff]
        %v379 = vld [vmem:[%s287 + $0x70] sm:$0xff]
        %v380 = vld [vmem:[%s287 + $0x78] sm:$0xff]
        %v381 = vld [vmem:[%s278] sm:$0xf]
        %v382 = vld [vmem:[%s278 + $0x4] sm:$0xf]
        %v383 = vld [vmem:[%s278 + $0x8] sm:$0xf]
        %v384 = vld [vmem:[%s278 + $0xc] sm:$0xf]
        %v385 = vld [vmem:[%s278 + $0x10] sm:$0xf]
        %v386 = vld [vmem:[%s278 + $0x14] sm:$0xf]
        %v387 = vld [vmem:[%s278 + $0x18] sm:$0xf]
        %v388 = vld [vmem:[%s278 + $0x1c] sm:$0xf]
        %v389 = vld [vmem:[%s278 + $0x20] sm:$0xf]
        %v390 = vld [vmem:[%s278 + $0x24] sm:$0xf]
        %v391 = vld [vmem:[%s278 + $0x28] sm:$0xf]
        %v392 = vld [vmem:[%s278 + $0x2c] sm:$0xf]
        %v393 = vld [vmem:[%s278 + $0x30] sm:$0xf]
        %v394 = vld [vmem:[%s278 + $0x34] sm:$0xf]
        %v395 = vld [vmem:[%s278 + $0x38] sm:$0xf]
        %v396 = vld [vmem:[%s278 + $0x3c] sm:$0xf]
        %v397 = vunpack.c.l.bf16 %v381
        %v398 = vunpack.c.l.bf16 %v382
        %v399 = vunpack.c.l.bf16 %v383
        %v400 = vunpack.c.l.bf16 %v384
        %v401 = vunpack.c.l.bf16 %v385
        %v402 = vunpack.c.l.bf16 %v386
        %v403 = vunpack.c.l.bf16 %v387
        %v404 = vunpack.c.l.bf16 %v388
        %v405 = vunpack.c.l.bf16 %v389
        %v406 = vunpack.c.l.bf16 %v390
        %v407 = vunpack.c.l.bf16 %v391
        %v408 = vunpack.c.l.bf16 %v392
        %v409 = vunpack.c.l.bf16 %v393
        %v410 = vunpack.c.l.bf16 %v394
        %v411 = vunpack.c.l.bf16 %v395
        %v412 = vunpack.c.l.bf16 %v396
        %413 = vmatprep.subr.mxu0 0.0
        %414 = vmatpush1.msra.mxu0 %v397
        %415 = vmatprep.subr.mxu0 0.0
        %416 = vmatpush1.msra.mxu0 %v398
        %417 = vmatprep.subr.mxu0 0.0
        %418 = vmatpush1.msra.mxu0 %v399
        %419 = vmatprep.subr.mxu0 0.0
        %420 = vmatpush1.msra.mxu0 %v400
        %421 = vmatprep.subr.mxu0 0.0
        %422 = vmatpush1.msra.mxu0 %v401
        %423 = vmatprep.subr.mxu0 0.0
        %424 = vmatpush1.msra.mxu0 %v402
        %425 = vmatprep.subr.mxu0 0.0
        %426 = vmatpush1.msra.mxu0 %v403
        %427 = vmatprep.subr.mxu0 0.0
        %428 = vmatpush1.msra.mxu0 %v404
        %429 = vmatprep.subr.mxu0 0.0
        %430 = vmatpush1.msra.mxu0 %v405
        %431 = vmatprep.subr.mxu0 0.0
        %432 = vmatpush1.msra.mxu0 %v406
        %433 = vmatprep.subr.mxu0 0.0
        %434 = vmatpush1.msra.mxu0 %v407
        %435 = vmatprep.subr.mxu0 0.0
        %436 = vmatpush1.msra.mxu0 %v408
        %437 = vmatprep.subr.mxu0 0.0
        %438 = vmatpush1.msra.mxu0 %v409
        %439 = vmatprep.subr.mxu0 0.0
        %440 = vmatpush1.msra.mxu0 %v410
        %441 = vmatprep.subr.mxu0 0.0
        %442 = vmatpush1.msra.mxu0 %v411
        %443 = vmatprep.subr.mxu0 0.0
        %444 = vmatpush1.msra.mxu0 %v412
        %445 = vmatprep.subr.mxu0 0.0
        %446 = vmatpush1.msra.mxu0 0.0
        %447 = vmatprep.subr.mxu0 0.0
        %448 = vmatpush1.msra.mxu0 0.0
        %449 = vmatprep.subr.mxu0 0.0
        %450 = vmatpush1.msra.mxu0 0.0
        %451 = vmatprep.subr.mxu0 0.0
        %452 = vmatpush1.msra.mxu0 0.0
        %453 = vmatprep.subr.mxu0 0.0
        %454 = vmatpush1.msra.mxu0 0.0
        %455 = vmatprep.subr.mxu0 0.0
        %456 = vmatpush1.msra.mxu0 0.0
        %457 = vmatprep.subr.mxu0 0.0
        %458 = vmatpush1.msra.mxu0 0.0
        %459 = vmatprep.subr.mxu0 0.0
        %460 = vmatpush1.msra.mxu0 0.0
        %461 = vmatprep.subr.mxu0 0.0
        %462 = vmatpush1.msra.mxu0 0.0
        %463 = vmatprep.subr.mxu0 0.0
        %464 = vmatpush1.msra.mxu0 0.0
        %465 = vmatprep.subr.mxu0 0.0
        %466 = vmatpush1.msra.mxu0 0.0
        %467 = vmatprep.subr.mxu0 0.0
        %468 = vmatpush1.msra.mxu0 0.0
        %469 = vmatprep.subr.mxu0 0.0
        %470 = vmatpush1.msra.mxu0 0.0
        %471 = vmatprep.subr.mxu0 0.0
        %472 = vmatpush1.msra.mxu0 0.0
        %473 = vmatprep.subr.mxu0 0.0
        %474 = vmatpush1.msra.mxu0 0.0
        %475 = vmatprep.subr.mxu0 0.0
        %476 = vmatpush1.msra.mxu0 0.0
        %477 = vmatprep.mubr.f32.mxu0 0.0
        %478 = vmatmul.mubr.f32.gmra.mrb[0].mxu0 %v365
        %v479 = vpop.f32.mrb[0].mxu0
        %v480 = vadd.f32 0.0, %v479
        %v481 = vpop.f32.mrb[0].mxu0
        %482 = vmatprep.mubr.f32.mxu0 0.0
        %483 = vmatmul.mubr.f32.gmra.mrb[0].mxu0 %v366
        %v484 = vpop.f32.mrb[0].mxu0
        %v485 = vadd.f32 0.0, %v484
        %v486 = vpop.f32.mrb[0].mxu0
        %487 = vmatprep.mubr.f32.mxu0 0.0
        %488 = vmatmul.mubr.f32.gmra.mrb[0].mxu0 %v367
        %v489 = vpop.f32.mrb[0].mxu0
        %v490 = vadd.f32 0.0, %v489
        %v491 = vpop.f32.mrb[0].mxu0
        %492 = vmatprep.mubr.f32.mxu0 0.0
        %493 = vmatmul.mubr.f32.gmra.mrb[0].mxu0 %v368
        %v494 = vpop.f32.mrb[0].mxu0
        %v495 = vadd.f32 0.0, %v494
        %v496 = vpop.f32.mrb[0].mxu0
        %497 = vmatprep.mubr.f32.mxu0 0.0
        %498 = vmatmul.mubr.f32.gmra.mrb[0].mxu0 %v369
        %v499 = vpop.f32.mrb[0].mxu0
        %v500 = vadd.f32 0.0, %v499
        %v501 = vpop.f32.mrb[0].mxu0
        %502 = vmatprep.mubr.f32.mxu0 0.0
        %503 = vmatmul.mubr.f32.gmra.mrb[0].mxu0 %v370
        %v504 = vpop.f32.mrb[0].mxu0
        %v505 = vadd.f32 0.0, %v504
        %v506 = vpop.f32.mrb[0].mxu0
        %507 = vmatprep.mubr.f32.mxu0 0.0
        %508 = vmatmul.mubr.f32.gmra.mrb[0].mxu0 %v371
        %v509 = vpop.f32.mrb[0].mxu0
        %v510 = vadd.f32 0.0, %v509
        %v511 = vpop.f32.mrb[0].mxu0
        %512 = vmatprep.mubr.f32.mxu0 0.0
        %513 = vmatmul.mubr.f32.gmra.mrb[0].mxu0 %v372
        %v514 = vpop.f32.mrb[0].mxu0
        %v515 = vadd.f32 0.0, %v514
        %v516 = vpop.f32.mrb[0].mxu0
        %517 = vmatprep.mubr.f32.mxu0 0.0
        %518 = vmatmul.mubr.f32.gmra.mrb[0].mxu0 %v373
        %v519 = vpop.f32.mrb[0].mxu0
        %v520 = vadd.f32 0.0, %v519
        %v521 = vpop.f32.mrb[0].mxu0
        %522 = vmatprep.mubr.f32.mxu0 0.0
        %523 = vmatmul.mubr.f32.gmra.mrb[0].mxu0 %v374
        %v524 = vpop.f32.mrb[0].mxu0
        %v525 = vadd.f32 0.0, %v524
        %v526 = vpop.f32.mrb[0].mxu0
        %527 = vmatprep.mubr.f32.mxu0 0.0
        %528 = vmatmul.mubr.f32.gmra.mrb[0].mxu0 %v375
        %v529 = vpop.f32.mrb[0].mxu0
        %v530 = vadd.f32 0.0, %v529
        %v531 = vpop.f32.mrb[0].mxu0
        %532 = vmatprep.mubr.f32.mxu0 0.0
        %533 = vmatmul.mubr.f32.gmra.mrb[0].mxu0 %v376
        %v534 = vpop.f32.mrb[0].mxu0
        %v535 = vadd.f32 0.0, %v534
        %v536 = vpop.f32.mrb[0].mxu0
        %537 = vmatprep.mubr.f32.mxu0 0.0
        %538 = vmatmul.mubr.f32.gmra.mrb[0].mxu0 %v377
        %v539 = vpop.f32.mrb[0].mxu0
        %v540 = vadd.f32 0.0, %v539
        %v541 = vpop.f32.mrb[0].mxu0
        %542 = vmatprep.mubr.f32.mxu0 0.0
        %543 = vmatmul.mubr.f32.gmra.mrb[0].mxu0 %v378
        %v544 = vpop.f32.mrb[0].mxu0
        %v545 = vadd.f32 0.0, %v544
        %v546 = vpop.f32.mrb[0].mxu0
        %547 = vmatprep.mubr.f32.mxu0 0.0
        %548 = vmatmul.mubr.f32.gmra.mrb[0].mxu0 %v379
        %v549 = vpop.f32.mrb[0].mxu0
        %v550 = vadd.f32 0.0, %v549
        %v551 = vpop.f32.mrb[0].mxu0
        %552 = vmatprep.mubr.f32.mxu0 0.0
        %553 = vmatmul.mubr.f32.gmra.mrb[0].mxu0 %v380
        %v554 = vpop.f32.mrb[0].mxu0
        %v555 = vadd.f32 0.0, %v554
        %v556 = vpop.f32.mrb[0].mxu0
        %557 = vdwg.mxu0
        %v558 = vadd.f32 %v349, %v480
        %v559 = vadd.f32 %v350, %v485
        %v560 = vadd.f32 %v351, %v490
        %v561 = vadd.f32 %v352, %v495
        %v562 = vadd.f32 %v353, %v500
        %v563 = vadd.f32 %v354, %v505
        %v564 = vadd.f32 %v355, %v510
        %v565 = vadd.f32 %v356, %v515
        %v566 = vadd.f32 %v357, %v520
        %v567 = vadd.f32 %v358, %v525
        %v568 = vadd.f32 %v359, %v530
        %v569 = vadd.f32 %v360, %v535
        %v570 = vadd.f32 %v361, %v540
        %v571 = vadd.f32 %v362, %v545
        %v572 = vadd.f32 %v363, %v550
        %v573 = vadd.f32 %v364, %v555
        %574 = vst [vmem:[#allocation2] sm:$0xff] %v558
        %575 = vst [vmem:[#allocation2 + $0x8] sm:$0xff] %v559
        %576 = vst [vmem:[#allocation2 + $0x10] sm:$0xff] %v560
        %577 = vst [vmem:[#allocation2 + $0x18] sm:$0xff] %v561
        %578 = vst [vmem:[#allocation2 + $0x20] sm:$0xff] %v562
        %579 = vst [vmem:[#allocation2 + $0x28] sm:$0xff] %v563
        %580 = vst [vmem:[#allocation2 + $0x30] sm:$0xff] %v564
        %581 = vst [vmem:[#allocation2 + $0x38] sm:$0xff] %v565
        %582 = vst [vmem:[#allocation2 + $0x40] sm:$0xff] %v566
        %583 = vst [vmem:[#allocation2 + $0x48] sm:$0xff] %v567
        %584 = vst [vmem:[#allocation2 + $0x50] sm:$0xff] %v568
        %585 = vst [vmem:[#allocation2 + $0x58] sm:$0xff] %v569
        %586 = vst [vmem:[#allocation2 + $0x60] sm:$0xff] %v570
        %587 = vst [vmem:[#allocation2 + $0x68] sm:$0xff] %v571
        %588 = vst [vmem:[#allocation2 + $0x70] sm:$0xff] %v572
        %589 = vst [vmem:[#allocation2 + $0x78] sm:$0xff] %v573
        %p590 = scmp.eq.s32.totalorder %s31, 7
        // Predicated region
        $region61: #{tpu_custom_call.1} parent=39 // pred_check
          %p591 = pneg %p590
        $region62: #{tpu_custom_call.1} parent=39 // pred_check_branch
          %593 = sbr.rel (%p591) target = $region64
        $region63: #{tpu_custom_call.1} parent=39 // pred_region
          %v594 = vld [vmem:[#allocation2] sm:$0xff]
          %v595 = vld [vmem:[#allocation2 + $0x8] sm:$0xff]
          %v596 = vld [vmem:[#allocation2 + $0x10] sm:$0xff]
          %v597 = vld [vmem:[#allocation2 + $0x18] sm:$0xff]
          %v598 = vld [vmem:[#allocation2 + $0x20] sm:$0xff]
          %v599 = vld [vmem:[#allocation2 + $0x28] sm:$0xff]
          %v600 = vld [vmem:[#allocation2 + $0x30] sm:$0xff]
          %v601 = vld [vmem:[#allocation2 + $0x38] sm:$0xff]
          %v602 = vld [vmem:[#allocation2 + $0x40] sm:$0xff]
          %v603 = vld [vmem:[#allocation2 + $0x48] sm:$0xff]
          %v604 = vld [vmem:[#allocation2 + $0x50] sm:$0xff]
          %v605 = vld [vmem:[#allocation2 + $0x58] sm:$0xff]
          %v606 = vld [vmem:[#allocation2 + $0x60] sm:$0xff]
          %v607 = vld [vmem:[#allocation2 + $0x68] sm:$0xff]
          %v608 = vld [vmem:[#allocation2 + $0x70] sm:$0xff]
          %v609 = vld [vmem:[#allocation2 + $0x78] sm:$0xff]
          %v610 = vpack.c.bf16 %v595, %v594
          %v611 = vpack.c.bf16 %v597, %v596
          %v612 = vpack.c.bf16 %v599, %v598
          %v613 = vpack.c.bf16 %v601, %v600
          %v614 = vpack.c.bf16 %v603, %v602
          %v615 = vpack.c.bf16 %v605, %v604
          %v616 = vpack.c.bf16 %v607, %v606
          %v617 = vpack.c.bf16 %v609, %v608
          %v618 = vld [vmem:[#allocation8] sm:$0xf]
          %v619 = vld [vmem:[#allocation8 + $0x4] sm:$0xf]
          %v620 = vld [vmem:[#allocation8 + $0x8] sm:$0xf]
          %v621 = vld [vmem:[#allocation8 + $0xc] sm:$0xf]
          %v622 = vld [vmem:[#allocation8 + $0x10] sm:$0xf]
          %v623 = vld [vmem:[#allocation8 + $0x14] sm:$0xf]
          %v624 = vld [vmem:[#allocation8 + $0x18] sm:$0xf]
          %v625 = vld [vmem:[#allocation8 + $0x1c] sm:$0xf]
          %v626 = vld [vmem:[#allocation8 + $0x20] sm:$0xf]
          %v627 = vld [vmem:[#allocation8 + $0x24] sm:$0xf]
          %v628 = vld [vmem:[#allocation8 + $0x28] sm:$0xf]
          %v629 = vld [vmem:[#allocation8 + $0x2c] sm:$0xf]
          %v630 = vld [vmem:[#allocation8 + $0x30] sm:$0xf]
          %v631 = vld [vmem:[#allocation8 + $0x34] sm:$0xf]
          %v632 = vld [vmem:[#allocation8 + $0x38] sm:$0xf]
          %v633 = vld [vmem:[#allocation8 + $0x3c] sm:$0xf]
          %v634 = vld [vmem:[%s3] sm:$0x1]
          %v636 = vlaneseq
          %v637 = vshrl.u32 %v636, 7
          %v638 = vsub.s32 0, %v637
          %v639 = vrot.slane %v634, %v638
          %v657 = vunpack.c.l.b16 %v618
          %v658 = vunpack.c.l.b16 %v619
          %v659 = vunpack.c.l.b16 %v620
          %v660 = vunpack.c.l.b16 %v621
          %v661 = vunpack.c.l.b16 %v622
          %v662 = vunpack.c.l.b16 %v623
          %v663 = vunpack.c.l.b16 %v624
          %v664 = vunpack.c.l.b16 %v625
          %v665 = vunpack.c.l.b16 %v626
          %v666 = vunpack.c.l.b16 %v627
          %v667 = vunpack.c.l.b16 %v628
          %v668 = vunpack.c.l.b16 %v629
          %v669 = vunpack.c.l.b16 %v630
          %v670 = vunpack.c.l.b16 %v631
          %v671 = vunpack.c.l.b16 %v632
          %v672 = vunpack.c.l.b16 %v633
          %v673 = vpack.c.b16 %v658, %v657
          %v674 = vpack.c.b16 %v660, %v659
          %v675 = vpack.c.b16 %v662, %v661
          %v676 = vpack.c.b16 %v664, %v663
          %v677 = vpack.c.b16 %v666, %v665
          %v678 = vpack.c.b16 %v668, %v667
          %v679 = vpack.c.b16 %v670, %v669
          %v680 = vpack.c.b16 %v672, %v671
          %689 = vmatprep.subr.bf16.mxu0 0
          %690 = vmatpush1.bf16.msra.mxu0 %v673
          %691 = vmatprep.subr.bf16.mxu0 0
          %692 = vmatpush1.bf16.msra.mxu0 %v674
          %693 = vmatprep.subr.bf16.mxu0 0
          %694 = vmatpush1.bf16.msra.mxu0 %v675
          %695 = vmatprep.subr.bf16.mxu0 0
          %696 = vmatpush1.bf16.msra.mxu0 %v676
          %697 = vmatprep.subr.bf16.mxu0 0
          %698 = vmatpush1.bf16.msra.mxu0 %v677
          %699 = vmatprep.subr.bf16.mxu0 0
          %700 = vmatpush1.bf16.msra.mxu0 %v678
          %701 = vmatprep.subr.bf16.mxu0 0
          %702 = vmatpush1.bf16.msra.mxu0 %v679
          %703 = vmatprep.subr.bf16.mxu0 0
          %704 = vmatpush1.bf16.msra.mxu0 %v680
          %705 = vmatprep.subr.bf16.mxu0 0
          %706 = vmatpush1.bf16.msra.mxu0 0
          %707 = vmatprep.subr.bf16.mxu0 0
          %708 = vmatpush1.bf16.msra.mxu0 0
          %709 = vmatprep.subr.bf16.mxu0 0
          %710 = vmatpush1.bf16.msra.mxu0 0
          %711 = vmatprep.subr.bf16.mxu0 0
          %712 = vmatpush1.bf16.msra.mxu0 0
          %713 = vmatprep.subr.bf16.mxu0 0
          %714 = vmatpush1.bf16.msra.mxu0 0
          %715 = vmatprep.subr.bf16.mxu0 0
          %716 = vmatpush1.bf16.msra.mxu0 0
          %717 = vmatprep.subr.bf16.mxu0 0
          %718 = vmatpush1.bf16.msra.mxu0 0
          %719 = vmatprep.subr.bf16.mxu0 0
          %720 = vmatpush1.bf16.msra.mxu0 0
          %721 = vmatprep.mubr.bf16.mxu0 0
          %722 = vmatmul.mubr.bf16.gmra.mrb[0].mxu0 %v610
          %v723 = vpop.f32.mrb[0].mxu0
          %v724 = vadd.f32 %v639, %v723
          %v725 = vpop.f32.mrb[0].mxu0
          %v726 = vpop.f32.mrb[0].mxu0
          %v727 = vadd.f32 %v639, %v726
          %v728 = vpop.f32.mrb[0].mxu0
          %729 = vmatprep.mubr.bf16.mxu0 0
          %730 = vmatmul.mubr.bf16.gmra.mrb[0].mxu0 %v611
          %v731 = vpop.f32.mrb[0].mxu0
          %v732 = vadd.f32 %v639, %v731
          %v733 = vpop.f32.mrb[0].mxu0
          %v734 = vpop.f32.mrb[0].mxu0
          %v735 = vadd.f32 %v639, %v734
          %v736 = vpop.f32.mrb[0].mxu0
          %737 = vmatprep.mubr.bf16.mxu0 0
          %738 = vmatmul.mubr.bf16.gmra.mrb[0].mxu0 %v612
          %v739 = vpop.f32.mrb[0].mxu0
          %v740 = vadd.f32 %v639, %v739
          %v741 = vpop.f32.mrb[0].mxu0
          %v742 = vpop.f32.mrb[0].mxu0
          %v743 = vadd.f32 %v639, %v742
          %v744 = vpop.f32.mrb[0].mxu0
          %745 = vmatprep.mubr.bf16.mxu0 0
          %746 = vmatmul.mubr.bf16.gmra.mrb[0].mxu0 %v613
          %v747 = vpop.f32.mrb[0].mxu0
          %v748 = vadd.f32 %v639, %v747
          %v749 = vpop.f32.mrb[0].mxu0
          %v750 = vpop.f32.mrb[0].mxu0
          %v751 = vadd.f32 %v639, %v750
          %v752 = vpop.f32.mrb[0].mxu0
          %753 = vmatprep.mubr.bf16.mxu0 0
          %754 = vmatmul.mubr.bf16.gmra.mrb[0].mxu0 %v614
          %v755 = vpop.f32.mrb[0].mxu0
          %v756 = vadd.f32 %v639, %v755
          %v757 = vpop.f32.mrb[0].mxu0
          %v758 = vpop.f32.mrb[0].mxu0
          %v759 = vadd.f32 %v639, %v758
          %v760 = vpop.f32.mrb[0].mxu0
          %761 = vmatprep.mubr.bf16.mxu0 0
          %762 = vmatmul.mubr.bf16.gmra.mrb[0].mxu0 %v615
          %v763 = vpop.f32.mrb[0].mxu0
          %v764 = vadd.f32 %v639, %v763
          %v765 = vpop.f32.mrb[0].mxu0
          %v766 = vpop.f32.mrb[0].mxu0
          %v767 = vadd.f32 %v639, %v766
          %v768 = vpop.f32.mrb[0].mxu0
          %769 = vmatprep.mubr.bf16.mxu0 0
          %770 = vmatmul.mubr.bf16.gmra.mrb[0].mxu0 %v616
          %v771 = vpop.f32.mrb[0].mxu0
          %v772 = vadd.f32 %v639, %v771
          %v773 = vpop.f32.mrb[0].mxu0
          %v774 = vpop.f32.mrb[0].mxu0
          %v775 = vadd.f32 %v639, %v774
          %v776 = vpop.f32.mrb[0].mxu0
          %777 = vmatprep.mubr.bf16.mxu0 0
          %778 = vmatmul.mubr.bf16.gmra.mrb[0].mxu0 %v617
          %v779 = vpop.f32.mrb[0].mxu0
          %v780 = vadd.f32 %v639, %v779
          %v781 = vpop.f32.mrb[0].mxu0
          %v782 = vpop.f32.mrb[0].mxu0
          %v783 = vadd.f32 %v639, %v782
          %v784 = vpop.f32.mrb[0].mxu0
          %785 = vdwg.mxu0
          %v786 = vlaneseq
          %v787 = vshrl.u32 %v786, 7
          %v788 = vadd.s32 %v787, 8
          %v789 = vadd.s32 %v787, 16
          %v790 = vadd.s32 %v787, 24
          %v791 = vadd.s32 %v787, 32
          %v792 = vadd.s32 %v787, 40
          %v793 = vadd.s32 %v787, 48
          %v794 = vadd.s32 %v787, 56
          %v795 = vadd.s32 %v787, 64
          %v796 = vadd.s32 %v787, 72
          %v797 = vadd.s32 %v787, 80
          %v798 = vadd.s32 %v787, 88
          %v799 = vadd.s32 %v787, 96
          %v800 = vadd.s32 %v787, 104
          %v801 = vadd.s32 %v787, 112
          %v802 = vadd.s32 %v787, 120
          %v803 = vlaneseq
          %v804 = vand.u32 %v803, 127
          %vm805 = vcmp.ge.s32.totalorder %v787, 1
          %vm806 = vcmp.ge.s32.totalorder %v788, 1
          %vm807 = vcmp.ge.s32.totalorder %v789, 1
          %vm808 = vcmp.ge.s32.totalorder %v790, 1
          %vm809 = vcmp.ge.s32.totalorder %v791, 1
          %vm810 = vcmp.ge.s32.totalorder %v792, 1
          %vm811 = vcmp.ge.s32.totalorder %v793, 1
          %vm812 = vcmp.ge.s32.totalorder %v794, 1
          %vm813 = vcmp.ge.s32.totalorder %v795, 1
          %vm814 = vcmp.ge.s32.totalorder %v796, 1
          %vm815 = vcmp.ge.s32.totalorder %v797, 1
          %vm816 = vcmp.ge.s32.totalorder %v798, 1
          %vm817 = vcmp.ge.s32.totalorder %v799, 1
          %vm818 = vcmp.ge.s32.totalorder %v800, 1
          %vm819 = vcmp.ge.s32.totalorder %v801, 1
          %vm820 = vcmp.ge.s32.totalorder %v802, 1
          %v821 = vsel %vm805, 1, 0
          %v822 = vsel %vm806, 1, 0
          %v823 = vsel %vm807, 1, 0
          %v824 = vsel %vm808, 1, 0
          %v825 = vsel %vm809, 1, 0
          %v826 = vsel %vm810, 1, 0
          %v827 = vsel %vm811, 1, 0
          %v828 = vsel %vm812, 1, 0
          %v829 = vsel %vm813, 1, 0
          %v830 = vsel %vm814, 1, 0
          %v831 = vsel %vm815, 1, 0
          %v832 = vsel %vm816, 1, 0
          %v833 = vsel %vm817, 1, 0
          %v834 = vsel %vm818, 1, 0
          %v835 = vsel %vm819, 1, 0
          %v836 = vsel %vm820, 1, 0
          %vm837 = vcmp.ge.s32.totalorder %v787, 5
          %vm838 = vcmp.ge.s32.totalorder %v788, 5
          %vm839 = vcmp.ge.s32.totalorder %v789, 5
          %vm840 = vcmp.ge.s32.totalorder %v790, 5
          %vm841 = vcmp.ge.s32.totalorder %v791, 5
          %vm842 = vcmp.ge.s32.totalorder %v792, 5
          %vm843 = vcmp.ge.s32.totalorder %v793, 5
          %vm844 = vcmp.ge.s32.totalorder %v794, 5
          %vm845 = vcmp.ge.s32.totalorder %v795, 5
          %vm846 = vcmp.ge.s32.totalorder %v796, 5
          %vm847 = vcmp.ge.s32.totalorder %v797, 5
          %vm848 = vcmp.ge.s32.totalorder %v798, 5
          %vm849 = vcmp.ge.s32.totalorder %v799, 5
          %vm850 = vcmp.ge.s32.totalorder %v800, 5
          %vm851 = vcmp.ge.s32.totalorder %v801, 5
          %vm852 = vcmp.ge.s32.totalorder %v802, 5
          %v853 = vsel %vm837, 1, 0
          %v854 = vsel %vm838, 1, 0
          %v855 = vsel %vm839, 1, 0
          %v856 = vsel %vm840, 1, 0
          %v857 = vsel %vm841, 1, 0
          %v858 = vsel %vm842, 1, 0
          %v859 = vsel %vm843, 1, 0
          %v860 = vsel %vm844, 1, 0
          %v861 = vsel %vm845, 1, 0
          %v862 = vsel %vm846, 1, 0
          %v863 = vsel %vm847, 1, 0
          %v864 = vsel %vm848, 1, 0
          %v865 = vsel %vm849, 1, 0
          %v866 = vsel %vm850, 1, 0
          %v867 = vsel %vm851, 1, 0
          %v868 = vsel %vm852, 1, 0
          %v869 = vadd.s32 %v821, %v853
          %v870 = vadd.s32 %v822, %v854
          %v871 = vadd.s32 %v823, %v855
          %v872 = vadd.s32 %v824, %v856
          %v873 = vadd.s32 %v825, %v857
          %v874 = vadd.s32 %v826, %v858
          %v875 = vadd.s32 %v827, %v859
          %v876 = vadd.s32 %v828, %v860
          %v877 = vadd.s32 %v829, %v861
          %v878 = vadd.s32 %v830, %v862
          %v879 = vadd.s32 %v831, %v863
          %v880 = vadd.s32 %v832, %v864
          %v881 = vadd.s32 %v833, %v865
          %v882 = vadd.s32 %v834, %v866
          %v883 = vadd.s32 %v835, %v867
          %v884 = vadd.s32 %v836, %v868
          %vm885 = vcmp.ge.s32.totalorder %v787, 14
          %vm886 = vcmp.ge.s32.totalorder %v788, 14
          %vm887 = vcmp.ge.s32.totalorder %v789, 14
          %vm888 = vcmp.ge.s32.totalorder %v790, 14
          %vm889 = vcmp.ge.s32.totalorder %v791, 14
          %vm890 = vcmp.ge.s32.totalorder %v792, 14
          %vm891 = vcmp.ge.s32.totalorder %v793, 14
          %vm892 = vcmp.ge.s32.totalorder %v794, 14
          %vm893 = vcmp.ge.s32.totalorder %v795, 14
          %vm894 = vcmp.ge.s32.totalorder %v796, 14
          %vm895 = vcmp.ge.s32.totalorder %v797, 14
          %vm896 = vcmp.ge.s32.totalorder %v798, 14
          %vm897 = vcmp.ge.s32.totalorder %v799, 14
          %vm898 = vcmp.ge.s32.totalorder %v800, 14
          %vm899 = vcmp.ge.s32.totalorder %v801, 14
          %vm900 = vcmp.ge.s32.totalorder %v802, 14
          %v901 = vsel %vm885, 1, 0
          %v902 = vsel %vm886, 1, 0
          %v903 = vsel %vm887, 1, 0
          %v904 = vsel %vm888, 1, 0
          %v905 = vsel %vm889, 1, 0
          %v906 = vsel %vm890, 1, 0
          %v907 = vsel %vm891, 1, 0
          %v908 = vsel %vm892, 1, 0
          %v909 = vsel %vm893, 1, 0
          %v910 = vsel %vm894, 1, 0
          %v911 = vsel %vm895, 1, 0
          %v912 = vsel %vm896, 1, 0
          %v913 = vsel %vm897, 1, 0
          %v914 = vsel %vm898, 1, 0
          %v915 = vsel %vm899, 1, 0
          %v916 = vsel %vm900, 1, 0
          %v917 = vadd.s32 %v869, %v901
          %v918 = vadd.s32 %v870, %v902
          %v919 = vadd.s32 %v871, %v903
          %v920 = vadd.s32 %v872, %v904
          %v921 = vadd.s32 %v873, %v905
          %v922 = vadd.s32 %v874, %v906
          %v923 = vadd.s32 %v875, %v907
          %v924 = vadd.s32 %v876, %v908
          %v925 = vadd.s32 %v877, %v909
          %v926 = vadd.s32 %v878, %v910
          %v927 = vadd.s32 %v879, %v911
          %v928 = vadd.s32 %v880, %v912
          %v929 = vadd.s32 %v881, %v913
          %v930 = vadd.s32 %v882, %v914
          %v931 = vadd.s32 %v883, %v915
          %v932 = vadd.s32 %v884, %v916
          %vm933 = vcmp.ge.s32.totalorder %v787, 50
          %vm934 = vcmp.ge.s32.totalorder %v788, 50
          %vm935 = vcmp.ge.s32.totalorder %v789, 50
          %vm936 = vcmp.ge.s32.totalorder %v790, 50
          %vm937 = vcmp.ge.s32.totalorder %v791, 50
          %vm938 = vcmp.ge.s32.totalorder %v792, 50
          %vm939 = vcmp.ge.s32.totalorder %v793, 50
          %vm940 = vcmp.ge.s32.totalorder %v794, 50
          %vm941 = vcmp.ge.s32.totalorder %v795, 50
          %vm942 = vcmp.ge.s32.totalorder %v796, 50
          %vm943 = vcmp.ge.s32.totalorder %v797, 50
          %vm944 = vcmp.ge.s32.totalorder %v798, 50
          %vm945 = vcmp.ge.s32.totalorder %v799, 50
          %vm946 = vcmp.ge.s32.totalorder %v800, 50
          %vm947 = vcmp.ge.s32.totalorder %v801, 50
          %vm948 = vcmp.ge.s32.totalorder %v802, 50
          %v949 = vsel %vm933, 1, 0
          %v950 = vsel %vm934, 1, 0
          %v951 = vsel %vm935, 1, 0
          %v952 = vsel %vm936, 1, 0
          %v953 = vsel %vm937, 1, 0
          %v954 = vsel %vm938, 1, 0
          %v955 = vsel %vm939, 1, 0
          %v956 = vsel %vm940, 1, 0
          %v957 = vsel %vm941, 1, 0
          %v958 = vsel %vm942, 1, 0
          %v959 = vsel %vm943, 1, 0
          %v960 = vsel %vm944, 1, 0
          %v961 = vsel %vm945, 1, 0
          %v962 = vsel %vm946, 1, 0
          %v963 = vsel %vm947, 1, 0
          %v964 = vsel %vm948, 1, 0
          %v965 = vadd.s32 %v917, %v949
          %v966 = vadd.s32 %v918, %v950
          %v967 = vadd.s32 %v919, %v951
          %v968 = vadd.s32 %v920, %v952
          %v969 = vadd.s32 %v921, %v953
          %v970 = vadd.s32 %v922, %v954
          %v971 = vadd.s32 %v923, %v955
          %v972 = vadd.s32 %v924, %v956
          %v973 = vadd.s32 %v925, %v957
          %v974 = vadd.s32 %v926, %v958
          %v975 = vadd.s32 %v927, %v959
          %v976 = vadd.s32 %v928, %v960
          %v977 = vadd.s32 %v929, %v961
          %v978 = vadd.s32 %v930, %v962
          %v979 = vadd.s32 %v931, %v963
          %v980 = vadd.s32 %v932, %v964
          %vm981 = vcmp.ge.s32.totalorder %v804, 32
          %v982 = vsel %vm981, 1, 0
          %vm983 = vcmp.ge.s32.totalorder %v804, 64
          %v984 = vsel %vm983, 1, 0
          %v985 = vadd.s32 %v982, %v984
          %vm986 = vcmp.ge.s32.totalorder %v804, 96
          %v987 = vsel %vm986, 1, 0
          %v988 = vadd.s32 %v985, %v987
          %vm989 = vcmp.eq.s32.totalorder %v965, %v988
          %vm990 = vcmp.eq.s32.totalorder %v966, %v988
          %vm991 = vcmp.eq.s32.totalorder %v967, %v988
          %vm992 = vcmp.eq.s32.totalorder %v968, %v988
          %vm993 = vcmp.eq.s32.totalorder %v969, %v988
          %vm994 = vcmp.eq.s32.totalorder %v970, %v988
          %vm995 = vcmp.eq.s32.totalorder %v971, %v988
          %vm996 = vcmp.eq.s32.totalorder %v972, %v988
          %vm997 = vcmp.eq.s32.totalorder %v973, %v988
          %vm998 = vcmp.eq.s32.totalorder %v974, %v988
          %vm999 = vcmp.eq.s32.totalorder %v975, %v988
          %vm1000 = vcmp.eq.s32.totalorder %v976, %v988
          %vm1001 = vcmp.eq.s32.totalorder %v977, %v988
          %vm1002 = vcmp.eq.s32.totalorder %v978, %v988
          %vm1003 = vcmp.eq.s32.totalorder %v979, %v988
          %vm1004 = vcmp.eq.s32.totalorder %v980, %v988
          %v1005 = vmax.f32 %v724, 0.0
          %v1006 = vmax.f32 %v727, 0.0
          %v1007 = vmax.f32 %v732, 0.0
          %v1008 = vmax.f32 %v735, 0.0
          %v1009 = vmax.f32 %v740, 0.0
          %v1010 = vmax.f32 %v743, 0.0
          %v1011 = vmax.f32 %v748, 0.0
          %v1012 = vmax.f32 %v751, 0.0
          %v1013 = vmax.f32 %v756, 0.0
          %v1014 = vmax.f32 %v759, 0.0
          %v1015 = vmax.f32 %v764, 0.0
          %v1016 = vmax.f32 %v767, 0.0
          %v1017 = vmax.f32 %v772, 0.0
          %v1018 = vmax.f32 %v775, 0.0
          %v1019 = vmax.f32 %v780, 0.0
          %v1020 = vmax.f32 %v783, 0.0
          %v1021 = vsel %vm989, %v1005, 0.0
          %v1022 = vsel %vm990, %v1006, 0.0
          %v1023 = vsel %vm991, %v1007, 0.0
          %v1024 = vsel %vm992, %v1008, 0.0
          %v1025 = vsel %vm993, %v1009, 0.0
          %v1026 = vsel %vm994, %v1010, 0.0
          %v1027 = vsel %vm995, %v1011, 0.0
          %v1028 = vsel %vm996, %v1012, 0.0
          %v1029 = vsel %vm997, %v1013, 0.0
          %v1030 = vsel %vm998, %v1014, 0.0
          %v1031 = vsel %vm999, %v1015, 0.0
          %v1032 = vsel %vm1000, %v1016, 0.0
          %v1033 = vsel %vm1001, %v1017, 0.0
          %v1034 = vsel %vm1002, %v1018, 0.0
          %v1035 = vsel %vm1003, %v1019, 0.0
          %v1036 = vsel %vm1004, %v1020, 0.0
          %v1037 = vpack.c.bf16 %v1022, %v1021
          %v1038 = vpack.c.bf16 %v1024, %v1023
          %v1039 = vpack.c.bf16 %v1026, %v1025
          %v1040 = vpack.c.bf16 %v1028, %v1027
          %v1041 = vpack.c.bf16 %v1030, %v1029
          %v1042 = vpack.c.bf16 %v1032, %v1031
          %v1043 = vpack.c.bf16 %v1034, %v1033
          %v1044 = vpack.c.bf16 %v1036, %v1035
          %v1045 = vld [vmem:[#allocation9] sm:$0xf]
          %v1046 = vld [vmem:[#allocation9 + $0x4] sm:$0xf]
          %v1047 = vld [vmem:[#allocation9 + $0x8] sm:$0xf]
          %v1048 = vld [vmem:[#allocation9 + $0xc] sm:$0xf]
          %v1049 = vld [vmem:[#allocation9 + $0x10] sm:$0xf]
          %v1050 = vld [vmem:[#allocation9 + $0x14] sm:$0xf]
          %v1051 = vld [vmem:[#allocation9 + $0x18] sm:$0xf]
          %v1052 = vld [vmem:[#allocation9 + $0x1c] sm:$0xf]
          %v1053 = vld [vmem:[#allocation9 + $0x20] sm:$0xf]
          %v1054 = vld [vmem:[#allocation9 + $0x24] sm:$0xf]
          %v1055 = vld [vmem:[#allocation9 + $0x28] sm:$0xf]
          %v1056 = vld [vmem:[#allocation9 + $0x2c] sm:$0xf]
          %v1057 = vld [vmem:[#allocation9 + $0x30] sm:$0xf]
          %v1058 = vld [vmem:[#allocation9 + $0x34] sm:$0xf]
          %v1059 = vld [vmem:[#allocation9 + $0x38] sm:$0xf]
          %v1060 = vld [vmem:[#allocation9 + $0x3c] sm:$0xf]
          %v1077 = vunpack.c.l.b16 %v1045
          %v1078 = vunpack.c.l.b16 %v1046
          %v1079 = vunpack.c.l.b16 %v1047
          %v1080 = vunpack.c.l.b16 %v1048
          %v1081 = vunpack.c.l.b16 %v1049
          %v1082 = vunpack.c.l.b16 %v1050
          %v1083 = vunpack.c.l.b16 %v1051
          %v1084 = vunpack.c.l.b16 %v1052
          %v1085 = vunpack.c.l.b16 %v1053
          %v1086 = vunpack.c.l.b16 %v1054
          %v1087 = vunpack.c.l.b16 %v1055
          %v1088 = vunpack.c.l.b16 %v1056
          %v1089 = vunpack.c.l.b16 %v1057
          %v1090 = vunpack.c.l.b16 %v1058
          %v1091 = vunpack.c.l.b16 %v1059
          %v1092 = vunpack.c.l.b16 %v1060
          %v1093 = vpack.c.b16 %v1078, %v1077
          %v1094 = vpack.c.b16 %v1080, %v1079
          %v1095 = vpack.c.b16 %v1082, %v1081
          %v1096 = vpack.c.b16 %v1084, %v1083
          %v1097 = vpack.c.b16 %v1086, %v1085
          %v1098 = vpack.c.b16 %v1088, %v1087
          %v1099 = vpack.c.b16 %v1090, %v1089
          %v1100 = vpack.c.b16 %v1092, %v1091
          %1109 = vmatprep.subr.bf16.mxu0 0
          %1110 = vmatpush1.bf16.msra.mxu0 %v1093
          %1111 = vmatprep.subr.bf16.mxu0 0
          %1112 = vmatpush1.bf16.msra.mxu0 %v1094
          %1113 = vmatprep.subr.bf16.mxu0 0
          %1114 = vmatpush1.bf16.msra.mxu0 %v1095
          %1115 = vmatprep.subr.bf16.mxu0 0
          %1116 = vmatpush1.bf16.msra.mxu0 %v1096
          %1117 = vmatprep.subr.bf16.mxu0 0
          %1118 = vmatpush1.bf16.msra.mxu0 %v1097
          %1119 = vmatprep.subr.bf16.mxu0 0
          %1120 = vmatpush1.bf16.msra.mxu0 %v1098
          %1121 = vmatprep.subr.bf16.mxu0 0
          %1122 = vmatpush1.bf16.msra.mxu0 %v1099
          %1123 = vmatprep.subr.bf16.mxu0 0
          %1124 = vmatpush1.bf16.msra.mxu0 %v1100
          %1125 = vmatprep.subr.bf16.mxu0 0
          %1126 = vmatpush1.bf16.msra.mxu0 0
          %1127 = vmatprep.subr.bf16.mxu0 0
          %1128 = vmatpush1.bf16.msra.mxu0 0
          %1129 = vmatprep.subr.bf16.mxu0 0
          %1130 = vmatpush1.bf16.msra.mxu0 0
          %1131 = vmatprep.subr.bf16.mxu0 0
          %1132 = vmatpush1.bf16.msra.mxu0 0
          %1133 = vmatprep.subr.bf16.mxu0 0
          %1134 = vmatpush1.bf16.msra.mxu0 0
          %1135 = vmatprep.subr.bf16.mxu0 0
          %1136 = vmatpush1.bf16.msra.mxu0 0
          %1137 = vmatprep.subr.bf16.mxu0 0
          %1138 = vmatpush1.bf16.msra.mxu0 0
          %1139 = vmatprep.subr.bf16.mxu0 0
          %1140 = vmatpush1.bf16.msra.mxu0 0
          %1141 = vmatprep.mubr.bf16.mxu0 0
          %1142 = vmatmul.mubr.bf16.gmra.mrb[0].mxu0 %v1037
          %v1143 = vpop.f32.mrb[0].mxu0
          %v1144 = vadd.f32 0.0, %v1143
          %v1145 = vpop.f32.mrb[0].mxu0
          %v1146 = vpop.f32.mrb[0].mxu0
          %v1147 = vadd.f32 0.0, %v1146
          %v1148 = vpop.f32.mrb[0].mxu0
          %1149 = vmatprep.mubr.bf16.mxu0 0
          %1150 = vmatmul.mubr.bf16.gmra.mrb[0].mxu0 %v1038
          %v1151 = vpop.f32.mrb[0].mxu0
          %v1152 = vadd.f32 0.0, %v1151
          %v1153 = vpop.f32.mrb[0].mxu0
          %v1154 = vpop.f32.mrb[0].mxu0
          %v1155 = vadd.f32 0.0, %v1154
          %v1156 = vpop.f32.mrb[0].mxu0
          %1157 = vmatprep.mubr.bf16.mxu0 0
          %1158 = vmatmul.mubr.bf16.gmra.mrb[0].mxu0 %v1039
          %v1159 = vpop.f32.mrb[0].mxu0
          %v1160 = vadd.f32 0.0, %v1159
          %v1161 = vpop.f32.mrb[0].mxu0
          %v1162 = vpop.f32.mrb[0].mxu0
          %v1163 = vadd.f32 0.0, %v1162
          %v1164 = vpop.f32.mrb[0].mxu0
          %1165 = vmatprep.mubr.bf16.mxu0 0
          %1166 = vmatmul.mubr.bf16.gmra.mrb[0].mxu0 %v1040
          %v1167 = vpop.f32.mrb[0].mxu0
          %v1168 = vadd.f32 0.0, %v1167
          %v1169 = vpop.f32.mrb[0].mxu0
          %v1170 = vpop.f32.mrb[0].mxu0
          %v1171 = vadd.f32 0.0, %v1170
          %v1172 = vpop.f32.mrb[0].mxu0
          %1173 = vmatprep.mubr.bf16.mxu0 0
          %1174 = vmatmul.mubr.bf16.gmra.mrb[0].mxu0 %v1041
          %v1175 = vpop.f32.mrb[0].mxu0
          %v1176 = vadd.f32 0.0, %v1175
          %v1177 = vpop.f32.mrb[0].mxu0
          %v1178 = vpop.f32.mrb[0].mxu0
          %v1179 = vadd.f32 0.0, %v1178
          %v1180 = vpop.f32.mrb[0].mxu0
          %1181 = vmatprep.mubr.bf16.mxu0 0
          %1182 = vmatmul.mubr.bf16.gmra.mrb[0].mxu0 %v1042
          %v1183 = vpop.f32.mrb[0].mxu0
          %v1184 = vadd.f32 0.0, %v1183
          %v1185 = vpop.f32.mrb[0].mxu0
          %v1186 = vpop.f32.mrb[0].mxu0
          %v1187 = vadd.f32 0.0, %v1186
          %v1188 = vpop.f32.mrb[0].mxu0
          %1189 = vmatprep.mubr.bf16.mxu0 0
          %1190 = vmatmul.mubr.bf16.gmra.mrb[0].mxu0 %v1043
          %v1191 = vpop.f32.mrb[0].mxu0
          %v1192 = vadd.f32 0.0, %v1191
          %v1193 = vpop.f32.mrb[0].mxu0
          %v1194 = vpop.f32.mrb[0].mxu0
          %v1195 = vadd.f32 0.0, %v1194
          %v1196 = vpop.f32.mrb[0].mxu0
          %1197 = vmatprep.mubr.bf16.mxu0 0
          %1198 = vmatmul.mubr.bf16.gmra.mrb[0].mxu0 %v1044
          %v1199 = vpop.f32.mrb[0].mxu0
          %v1200 = vadd.f32 0.0, %v1199
          %v1201 = vpop.f32.mrb[0].mxu0
          %v1202 = vpop.f32.mrb[0].mxu0
          %v1203 = vadd.f32 0.0, %v1202
          %v1204 = vpop.f32.mrb[0].mxu0
          %1205 = vdwg.mxu0
          %v1206 = vpack.c.bf16 %v1147, %v1144
          %v1207 = vpack.c.bf16 %v1155, %v1152
          %v1208 = vpack.c.bf16 %v1163, %v1160
          %v1209 = vpack.c.bf16 %v1171, %v1168
          %v1210 = vpack.c.bf16 %v1179, %v1176
          %v1211 = vpack.c.bf16 %v1187, %v1184
          %v1212 = vpack.c.bf16 %v1195, %v1192
          %v1213 = vpack.c.bf16 %v1203, %v1200
          %v1222 = vunpack.c.l.b16 %v1206
          %v1223 = vunpack.c.h.b16 %v1206
          %v1224 = vunpack.c.l.b16 %v1207
          %v1225 = vunpack.c.h.b16 %v1207
          %v1226 = vunpack.c.l.b16 %v1208
          %v1227 = vunpack.c.h.b16 %v1208
          %v1228 = vunpack.c.l.b16 %v1209
          %v1229 = vunpack.c.h.b16 %v1209
          %v1230 = vunpack.c.l.b16 %v1210
          %v1231 = vunpack.c.h.b16 %v1210
          %v1232 = vunpack.c.l.b16 %v1211
          %v1233 = vunpack.c.h.b16 %v1211
          %v1234 = vunpack.c.l.b16 %v1212
          %v1235 = vunpack.c.h.b16 %v1212
          %v1236 = vunpack.c.l.b16 %v1213
          %v1237 = vunpack.c.h.b16 %v1213
          %v1238 = vpack.c.b16 %v1222, %v1222
          %v1239 = vpack.c.b16 %v1223, %v1223
          %v1240 = vpack.c.b16 %v1224, %v1224
          %v1241 = vpack.c.b16 %v1225, %v1225
          %v1242 = vpack.c.b16 %v1226, %v1226
          %v1243 = vpack.c.b16 %v1227, %v1227
          %v1244 = vpack.c.b16 %v1228, %v1228
          %v1245 = vpack.c.b16 %v1229, %v1229
          %v1246 = vpack.c.b16 %v1230, %v1230
          %v1247 = vpack.c.b16 %v1231, %v1231
          %v1248 = vpack.c.b16 %v1232, %v1232
          %v1249 = vpack.c.b16 %v1233, %v1233
          %v1250 = vpack.c.b16 %v1234, %v1234
          %v1251 = vpack.c.b16 %v1235, %v1235
          %v1252 = vpack.c.b16 %v1236, %v1236
          %v1253 = vpack.c.b16 %v1237, %v1237
          %1270 = vst [vmem:[%s326] sm:$0xf] %v1238
          %1271 = vst [vmem:[%s326 + $0x4] sm:$0xf] %v1239
          %1272 = vst [vmem:[%s326 + $0x8] sm:$0xf] %v1240
          %1273 = vst [vmem:[%s326 + $0xc] sm:$0xf] %v1241
          %1274 = vst [vmem:[%s326 + $0x10] sm:$0xf] %v1242
          %1275 = vst [vmem:[%s326 + $0x14] sm:$0xf] %v1243
          %1276 = vst [vmem:[%s326 + $0x18] sm:$0xf] %v1244
          %1277 = vst [vmem:[%s326 + $0x1c] sm:$0xf] %v1245
          %1278 = vst [vmem:[%s326 + $0x20] sm:$0xf] %v1246
          %1279 = vst [vmem:[%s326 + $0x24] sm:$0xf] %v1247
          %1280 = vst [vmem:[%s326 + $0x28] sm:$0xf] %v1248
          %1281 = vst [vmem:[%s326 + $0x2c] sm:$0xf] %v1249
          %1282 = vst [vmem:[%s326 + $0x30] sm:$0xf] %v1250
          %1283 = vst [vmem:[%s326 + $0x34] sm:$0xf] %v1251
          %1284 = vst [vmem:[%s326 + $0x38] sm:$0xf] %v1252
          %1285 = vst [vmem:[%s326 + $0x3c] sm:$0xf] %v1253
        $region64: #{tpu_custom_call.1} parent=39 // pred_fallthru
          _
        %s1286 = sand.u32 %s163, 1
        %s1287 = scalar_lea.sflag [#allocation5], %s1286
        %s1288 = sand.u32 %s163, 1
        %s1289 = smul.addr %s1288, 64
        %s1290 = scalar_lea.vmem [#allocation11], %s1289
        // Predicated region
        $region65: #{tpu_custom_call.1} parent=39 // pred_check
          %p1291 = pneg %p173
        $region66: #{tpu_custom_call.1} parent=39 // pred_check_branch
          %1293 = sbr.rel (%p1291) target = $region68
        $region67: #{tpu_custom_call.1} parent=39 // pred_region
          %s1295 = ssub.s32 1024, 1024
          %1296 = vsyncadd %s1287, %s1295
          %s1297 = smul.addr %s30, 16
          %s1298 = smul.addr %s1297, 64
          %s1299 = scalar_lea.hbm %s5, %s1298
          %s1300 = sshll.u32 %s1290, 4
          %s1301 = int_to_ptr.vmem [resolvable:$true] %s1300
          %1306 = dma.vmem_to_hbm [thread:$0]  %s1301, 1024, %s1299, %s1287, 64, 64, 4
        $region68: #{tpu_custom_call.1} parent=39 // pred_fallthru
          _
      $region40: #{tpu_custom_call.1} parent=5 // pred_fallthru
        _
      %p1307 = scmp.le.s32.totalorder 2, %s21
      // Predicated region
      $region69: #{tpu_custom_call.1} parent=5 // pred_check
        %p1308 = pneg %p1307
      $region70: #{tpu_custom_call.1} parent=5 // pred_check_branch
        %1310 = sbr.rel (%p1308) target = $region72
      $region71: #{tpu_custom_call.1} parent=5 // pred_region
        %s1311 = ssub.s32 %s21, 2
        // Predicated region
        $region73: #{tpu_custom_call.1} parent=71 // pred_check
          %p1312 = pneg %p179
        $region74: #{tpu_custom_call.1} parent=71 // pred_check_branch
          %1314 = sbr.rel (%p1312) target = $region76
        $region75: #{tpu_custom_call.1} parent=71 // pred_region
          %s1315 = sand.u32 %s164, 1
          %s1316 = scalar_lea.sflag [#allocation5], %s1315
          %s1317 = sand.u32 %s164, 1
          %s1318 = smul.addr %s1317, 64
          %s1319 = scalar_lea.vmem [#allocation11], %s1318
          %1320 = dma.done %s1316, 1024
        $region76: #{tpu_custom_call.1} parent=71 // pred_fallthru
          _
      $region72: #{tpu_custom_call.1} parent=5 // pred_fallthru
        _
    $region6: #{tpu_custom_call.1} parent=1 // loop_footer
      %s25 = sadd.s32 1, %s21
    $region7: #{tpu_custom_call.1} parent=1 // loop_footer_branch
      %20 = sbr.rel target = $region3
    $region8: #{tpu_custom_call.1} parent=1 // loop_exit
      _
    %1321 = vsyncpa [#allocation4], 1
    %s1322 = scalar_lea.sflag [#allocation4], 1
    %1323 = vsyncpa %s1322, 1
    %1324 = vsyncpa [#allocation7], 1
    %s1325 = scalar_lea.sflag [#allocation7], 1
    %1326 = vsyncpa %s1325, 1
    %1327 = vsyncpa [#allocation10], 1
    %1328 = vsyncpa [#allocation5], 1
    %s1329 = scalar_lea.sflag [#allocation5], 1
    %1330 = vsyncpa %s1329, 1

</llo_original>
